<compile_context>
chip_gen: v6e
topology: v6e:2x2x1
jax: 0.10.0
libtpu: 0.0.40
codegen_flags: <defaults>
</compile_context>

<pallas_src>
import functools

import jax
import jax.numpy as jnp
from jax import lax
from jax.experimental import pallas as pl
from jax.experimental.pallas import tpu as pltpu

F32 = jnp.float32
_VMEM = pl.BlockSpec(memory_space=pltpu.MemorySpace.VMEM)

# Procrustes-stat lanes inside the 128-lane metrics slab:
#   3 sum_pred + 1 sum|pred|^2 + 9 cross(pred,gt) + 3 sum_gt
_N_STAT_LANES = 16


def _tpu_vmem_capacity():
    try:
        return int(pltpu.get_tpu_info().vmem_capacity_bytes)
    except Exception:                       # not on TPU / query unavailable
        return 64 * 1024 * 1024             # conservative: v7x per-TC budget


def _pick_mn_block(multi_n, V):
    """Largest divisor of multi_n whose double-buffered pred block fits a
    generation-aware share of VMEM (cap 64 on v7x, 128 on v5e/v6e)."""
    cap_bytes = _tpu_vmem_capacity()
    hw_cap = 128 if cap_bytes >= 100 * 1024 * 1024 else 64
    per_row = 3 * V * 4 * 2                 # f32 pred bytes per mn row, x2 buffers
    cap = max(8, min(hw_cap, (cap_bytes // 4) // max(per_row, 1)))
    if multi_n <= cap:
        return multi_n
    for d in range(cap, 7, -1):
        if d % 8 == 0 and multi_n % d == 0:
            return d
    return multi_n                          # realistic multi_n is small


def _vmem_limit(block_bytes):
    """Actual double-buffered need + headroom, never more than ~70% of the
    physical per-TC VMEM (v7x only has 64 MiB/TC; v5e/v6e have 128 MiB)."""
    cap = _tpu_vmem_capacity()
    need = 2 * block_bytes + (8 << 20)
    return int(min(max(need, 16 << 20), int(cap * 0.7)))


# ---------------------------------------------------------------------------
# Kernel 1: joint regression (MXU), pelvis root alignment, MPVPE / MPJPE,
#           J14 joints and Procrustes sufficient statistics.
#
# Slab lane layout (J = n_j14):
#   0                  mpvpe (mm)
#   1                  mpjpe_body (mm)
#   2        .. 2+3J   pred J14 joints   (x | y | z blocks)
#   2+3J     .. 2+6J   gt   J14 joints   (x | y | z blocks, row-broadcast)
#   2+6J     .. +3     sum_v pred_c                       (Procrustes stats)
#   2+6J+3   .. +1     sum_v sum_c pred_c^2
#   2+6J+4   .. +9     sum_v pred_c * gt_c'   (pred-coord major 3x3)
#   2+6J+13  .. +3     sum_v gt_c
#   remaining          zeros
# ---------------------------------------------------------------------------
def _metrics_kernel(mesh_ref, gt_ref, reg_ref, rsum_ref, out_ref, *, n_j14):
    J = n_j14
    mn = mesh_ref.shape[2]
    V = mesh_ref.shape[3]

    reg = reg_ref[...]                        # [V, J+1] (pelvis row folded in)
    rowsum = rsum_ref[...]                    # [1, J]

    mo = mesh_ref[...]                        # [3, 1, mn, V]
    if mo.dtype != F32:                       # upcast once, right after the load
        mo = mo.astype(F32)
    mo = mo.reshape(3, mn, V)
    g3 = gt_ref[...]
    if g3.dtype != F32:
        g3 = g3.astype(F32)
    g3 = g3.reshape(3, V)

    # --- MXU: all 3 pred coords in one stacked push + one gt push -----------
    if mn % 8 == 0:
        jm_all = jnp.dot(mo.reshape(3 * mn, V), reg, preferred_element_type=F32)
        jm_list = [jm_all[c * mn:(c + 1) * mn] for c in range(3)]
    else:                                     # tiny/odd blocks: skip the relayout
        jm_list = [jnp.dot(mo[c], reg, preferred_element_type=F32)
                   for c in range(3)]
    jg_all = jnp.dot(g3, reg, preferred_element_type=F32)          # [3, J+1]

    vsq = None
    jsq = None
    sum_pp = None
    jo_cols, jg_cols, sum_p_cols, sum_g_cols, cross_cols = [], [], [], [], []

    for c in range(3):                        # static 3-coordinate loop
        mo_c = mo[c]                          # [mn, V]
        g_c = g3[c:c + 1]                     # [1, V]
        jm_c = jm_list[c]                     # [mn, J+1]
        jo_c = jm_c[:, :J]                    # pred J14 joints
        root_o = jm_c[:, J:J + 1]             # pred pelvis
        jg_c = jg_all[c:c + 1, :J]            # gt J14 joints
        root_g = jg_all[c:c + 1, J:J + 1]     # gt pelvis
        shift = root_g - root_o               # [mn, 1]

        d = (mo_c + shift) - g_c              # root-aligned vertex error
        vsq = d * d if vsq is None else vsq + d * d

        # exact: J14 @ (mesh + shift) = jo + shift * rowsum  (no extra matmul)
        jd = (jo_c + shift * rowsum) - jg_c
        jsq = jd * jd if jsq is None else jsq + jd * jd

        jo_cols.append(jo_c)
        jg_cols.append(jnp.broadcast_to(jg_c, (mn, J)))

        # Procrustes sufficient statistics (ride on already-resident data)
        sum_p_cols.append(jnp.sum(mo_c, axis=-1, keepdims=True))
        pp = jnp.sum(mo_c * mo_c, axis=-1, keepdims=True)
        sum_pp = pp if sum_pp is None else sum_pp + pp
        sum_g_cols.append(jnp.broadcast_to(
            jnp.sum(g_c, axis=-1, keepdims=True), (mn, 1)))
        for c2 in range(3):
            cross_cols.append(
                jnp.sum(mo_c * g3[c2:c2 + 1], axis=-1, keepdims=True))

    mpvpe = jnp.mean(jnp.sqrt(vsq), axis=-1, keepdims=True) * 1000.0
    mpjpe = jnp.mean(jnp.sqrt(jsq), axis=-1, keepdims=True) * 1000.0

    pieces = ([mpvpe, mpjpe] + jo_cols + jg_cols
              + sum_p_cols + [sum_pp] + cross_cols + sum_g_cols)
    used = 2 + 6 * J + _N_STAT_LANES
    if used < 128:
        pieces.append(jnp.zeros((mn, 128 - used), F32))
    out_ref[...] = jnp.concatenate(pieces, axis=-1)[None]   # one dense store


def compute_metrics(pred_t, gt_t, j_regressor, j14_regressor, pelvis_idx):
    """pred_t: [3, bs, multi_n, V]; gt_t: [bs, 3, V] -> slab [bs, multi_n, 128]."""
    _, bs, multi_n, V = pred_t.shape
    J = j14_regressor.shape[0]
    assert 2 + 6 * J + _N_STAT_LANES <= 128

    # pelvis row folded into the regressor -> everything on the MXU.
    reg_t = jnp.concatenate(
        [jnp.transpose(j14_regressor).astype(F32),
         jnp.transpose(j_regressor[pelvis_idx:pelvis_idx + 1, :]).astype(F32)],
        axis=1)                                               # [V, J+1]
    rowsum = jnp.sum(j14_regressor.astype(F32), axis=1)[None, :]   # [1, J]

    mn_blk = _pick_mn_block(multi_n, V)
    grid = (bs, multi_n // mn_blk)            # on v7x keep bs >= 2 to feed 2 TCs
    esz = jnp.dtype(pred_t.dtype).itemsize
    blk_bytes = (3 * mn_blk * V * esz + 3 * V * 4 + V * (J + 1) * 4
                 + mn_blk * 128 * 4)

    return pl.pallas_call(
        functools.partial(_metrics_kernel, n_j14=J),
        grid=grid,
        in_specs=[
            pl.BlockSpec((3, 1, mn_blk, V), lambda b, m: (0, b, m, 0)),
            pl.BlockSpec((1, 3, V), lambda b, m: (b, 0, 0)),
            pl.BlockSpec((V, J + 1), lambda b, m: (0, 0)),
            pl.BlockSpec((1, J), lambda b, m: (0, 0)),
        ],
        out_specs=pl.BlockSpec((1, mn_blk, 128), lambda b, m: (b, m, 0)),
        out_shape=jax.ShapeDtypeStruct((bs, multi_n, 128), F32),
        compiler_params=pltpu.CompilerParams(
            dimension_semantics=("parallel", "parallel"),
            vmem_limit_bytes=_vmem_limit(blk_bytes)),
    )(pred_t, gt_t, reg_t, rowsum)


# ---------------------------------------------------------------------------
# Kernel 2: PA point error with the similarity transform applied in-kernel.
#   aligned_c = scale * sum_c2 R[c,c2] * pred_c2 + t[c]
#   err = mean_v sqrt(sum_c (aligned_c - gt_c)^2) * 1000
# The aligned mesh is never materialized; pred_t is re-read coordinate-major.
# ---------------------------------------------------------------------------
def _pa_point_error_kernel(mesh_ref, gt_ref, rst_ref, out_ref):
    mn = mesh_ref.shape[2]
    V = mesh_ref.shape[3]

    mo = mesh_ref[...]
    if mo.dtype != F32:
        mo = mo.astype(F32)
    mo = mo.reshape(3, mn, V)
    g3 = gt_ref[...]
    if g3.dtype != F32:
        g3 = g3.astype(F32)
    g3 = g3.reshape(3, V)
    rst = rst_ref[...].reshape(mn, 16)        # [scale | R row-major(9) | t(3) | pad]
    scale = rst[:, 0:1]

    sq = None
    for c in range(3):
        a = None
        for c2 in range(3):
            r = rst[:, 1 + 3 * c + c2: 2 + 3 * c + c2]       # [mn, 1]
            term = r * mo[c2]
            a = term if a is None else a + term
        a = scale * a + rst[:, 10 + c: 11 + c]
        d = a - g3[c:c + 1]
        sq = d * d if sq is None else sq + d * d

    err = jnp.mean(jnp.sqrt(sq), axis=-1, keepdims=True) * 1000.0
    row = jnp.concatenate([err, jnp.zeros((mn, 127), F32)], axis=-1)
    out_ref[...] = row[None]                  # single lane-dense store


def pa_point_error(pred_t, gt_t, rst):
    """pred_t: [3, bs, mn, V]; gt_t: [bs, 3, V]; rst: [bs, mn, 16] -> [bs, mn] (mm)."""
    _, bs, multi_n, V = pred_t.shape
    mn_blk = _pick_mn_block(multi_n, V)
    grid = (bs, multi_n // mn_blk)
    esz = jnp.dtype(pred_t.dtype).itemsize
    blk_bytes = (3 * mn_blk * V * esz + 3 * V * 4
                 + mn_blk * 16 * 4 + mn_blk * 128 * 4)

    out = pl.pallas_call(
        _pa_point_error_kernel,
        grid=grid,
        in_specs=[
            pl.BlockSpec((3, 1, mn_blk, V), lambda b, m: (0, b, m, 0)),
            pl.BlockSpec((1, 3, V), lambda b, m: (b, 0, 0)),
            pl.BlockSpec((1, mn_blk, 16), lambda b, m: (b, m, 0)),
        ],
        out_specs=pl.BlockSpec((1, mn_blk, 128), lambda b, m: (b, m, 0)),
        out_shape=jax.ShapeDtypeStruct((bs, multi_n, 128), F32),
        compiler_params=pltpu.CompilerParams(
            dimension_semantics=("parallel", "parallel"),
            vmem_limit_bytes=_vmem_limit(blk_bytes)),
    )(pred_t, gt_t, rst)
    return out[..., 0]


# ---------------------------------------------------------------------------
# Kernel 3: fused 4x RankNet losses + 4x MSE(score, error_2_score(metric)).
# Shared softplus BCE terms, torch-equivalent -100 log clamping, one [1,8] store.
# ---------------------------------------------------------------------------
def _loss_kernel(sraw_ref, s_ref, rank_ref, metric_ref, mask_ref, out_ref,
                 *, sigma, bounds):
    sraw = sraw_ref[...]                              # [bs, m]
    s = s_ref[...]                                    # [bs, m]
    mask = mask_ref[...]                              # [bs, 1]
    bs, m = sraw.shape

    x = sigma * (sraw[:, :, None] - sraw[:, None, :])          # [bs, m, m]
    # log sigmoid(x) = -softplus(-x); log(1-sigmoid(x)) = -softplus(x)
    # torch clamps logs at -100  ->  cap softplus at 100.
    sp_neg = jnp.minimum(jax.nn.softplus(-x), 100.0)
    sp_pos = jnp.minimum(jax.nn.softplus(x), 100.0)

    row = lax.broadcasted_iota(jnp.int32, (m, m), 0)
    col = lax.broadcasted_iota(jnp.int32, (m, m), 1)
    triu = (col > row).astype(F32)[None, :, :]                  # strict upper

    inv_bs = 1.0 / bs
    inv_bsm = 1.0 / (bs * m)
    vals = []
    for k in range(4):                                          # rank losses
        r = rank_ref[k]                                         # [bs, m]
        t = 0.5 * (1.0 + jnp.clip(r[:, :, None] - r[:, None, :], -1.0, 1.0))
        bce = (t * sp_neg + (1.0 - t) * sp_pos) * triu
        per_b = jnp.sum(jnp.sum(bce, axis=2), axis=1, keepdims=True)   # [bs,1]
        vals.append(jnp.sum(per_b * mask, axis=0, keepdims=True) * inv_bs)
    for k in range(4):                                          # MSE losses
        emin, emax = bounds[k]
        tgt = jnp.clip((emax - metric_ref[k]) / (emax - emin), 0.0, 1.0)
        d = s - tgt
        vals.append(jnp.sum(jnp.sum(d * d, axis=1, keepdims=True),
                            axis=0, keepdims=True) * inv_bsm)
    out_ref[...] = jnp.concatenate(vals, axis=-1)               # one [1,8] store


def fused_rank_mse_loss(score_raw, score, ranks, metrics, mask, sigma,
                        bounds=((10.0, 300.0), (10.0, 150.0),
                                (10.0, 300.0), (10.0, 150.0))):
    out = pl.pallas_call(
        functools.partial(_loss_kernel, sigma=float(sigma),
                          bounds=tuple(tuple(map(float, b)) for b in bounds)),
        out_shape=jax.ShapeDtypeStruct((1, 8), F32),
        in_specs=[_VMEM] * 5,
        out_specs=_VMEM,
    )(score_raw, score, ranks, metrics, mask)
    return out[0]


# ---------------------------------------------------------------------------
# Procrustes (similarity) alignment.
# TODO(synk): SVD has no Pallas equivalent; the 3x3 SVDs stay in plain JAX.
# ---------------------------------------------------------------------------
def _procrustes_from_stats(sum_p, sum_pp, cross, sum_g, n_points):
    """scale, R, t from per-sample sufficient statistics.
    sum_p/sum_g: [..., 3]; sum_pp: [...]; cross[..., i, j] = sum_v pred_i*gt_j."""
    P = float(n_points)
    mu_p = sum_p / P
    mu_g = sum_g / P
    cov = cross / P - mu_p[..., :, None] * mu_g[..., None, :]
    var_p = sum_pp / P - jnp.sum(mu_p * mu_p, axis=-1)
    U, S, Vt = jnp.linalg.svd(cov)
    Vm = jnp.swapaxes(Vt, -1, -2)
    det = jnp.linalg.det(jnp.einsum('...ij,...kj->...ik', Vm, U))
    d = jnp.where(det < 0, -1.0, 1.0)
    S = S.at[..., -1].multiply(d)
    Vm = Vm.at[..., :, -1].multiply(d[..., None])
    R = jnp.einsum('...ij,...kj->...ik', Vm, U)
    scale = S.sum(axis=-1) / var_p
    t = mu_g - scale[..., None] * jnp.einsum('...ij,...j->...i', R, mu_p)
    return scale, R, t


def batch_rigid_align(pred, gt):
    """pred: [bs, m, P, 3], gt: [bs, 1, P, 3] -> aligned pred. (Joints only: P=14.)"""
    gt = jnp.broadcast_to(gt, pred.shape)
    n_points = pred.shape[-2]
    mu_p = pred.mean(axis=-2, keepdims=True)
    mu_g = gt.mean(axis=-2, keepdims=True)
    p0 = pred - mu_p
    g0 = gt - mu_g
    cov = jnp.einsum('...pi,...pj->...ij', p0, g0) / n_points
    U, S, Vt = jnp.linalg.svd(cov)
    V = jnp.swapaxes(Vt, -1, -2)
    det = jnp.linalg.det(jnp.einsum('...ij,...kj->...ik', V, U))
    d = jnp.where(det < 0, -1.0, 1.0)
    S = S.at[..., -1].multiply(d)
    V = V.at[..., :, -1].multiply(d[..., None])
    R = jnp.einsum('...ij,...kj->...ik', V, U)
    var_p = jnp.var(pred, axis=-2).sum(axis=-1)
    scale = S.sum(axis=-1) / var_p
    t = mu_g - scale[..., None, None] * jnp.einsum('...ij,...pj->...pi', R, mu_p)
    return scale[..., None, None] * jnp.einsum('...ij,...pj->...pi', R, pred) + t


# ---------------------------------------------------------------------------
# ScoreLoss module
# ---------------------------------------------------------------------------
class ScoreLoss:
    def __init__(self, j_regressor, j14_regressor, pelvis_idx):
        self.weight_mpvpe = 1.0
        self.weight_pa_mppve = 1.0
        self.weight_mpjpe = 1.0
        self.weight_pa_mpjpe = 1.0
        self.weight_mpvpe_mse = 100.0
        self.weight_pa_mppve_mse = 100.0
        self.weight_mpjpe_mse = 100.0
        self.weight_pa_mpjpe_mse = 100.0
        self.sigma = 5.0
        self.j_regressor = j_regressor
        self.j14_regressor = j14_regressor
        self.pelvis_idx = pelvis_idx

    def __call__(self, score_raw, score, output, gt):
        gt_mesh = gt['mesh']                              # [bs, V, 3]
        out_mesh = output['mesh']                         # [bs*multi_n, V, 3]
        bs, V, _ = gt_mesh.shape
        assert out_mesh.shape[0] % bs == 0
        multi_n = out_mesh.shape[0] // bs
        J = self.j14_regressor.shape[0]

        # Layout glue: ONE coordinate-major transpose per mesh, no standalone
        # astype pass (kernels upcast after the load), no gt repeat.
        pred_t = jnp.transpose(out_mesh.reshape(bs, multi_n, V, 3), (3, 0, 1, 2))
        gt_t = jnp.transpose(gt_mesh, (0, 2, 1))          # [bs, 3, V]

        slab = compute_metrics(pred_t, gt_t, self.j_regressor,
                               self.j14_regressor, self.pelvis_idx)
        mpvpe = slab[..., 0]                              # [bs, mn]
        mpjpe_body = slab[..., 1]                         # [bs, mn]
        joint_out_cm = slab[..., 2:2 + 3 * J].reshape(bs, multi_n, 3, J)
        joint_gt_cm = slab[:, 0, 2 + 3 * J:2 + 6 * J].reshape(bs, 3, J)
        offs = 2 + 6 * J
        sum_p = slab[..., offs:offs + 3]                  # [bs, mn, 3]
        sum_pp = slab[..., offs + 3]                      # [bs, mn]
        cross = slab[..., offs + 4:offs + 13].reshape(bs, multi_n, 3, 3)
        sum_g = slab[..., offs + 13:offs + 16]            # [bs, mn, 3]

        eval_result = {'mpvpe_all': mpvpe, 'mpjpe_body': mpjpe_body}

        # PA mesh metric: 3x3 SVD from in-kernel sufficient statistics; the
        # similarity transform is applied per-vertex inside the Pallas kernel.
        scale, R, t = _procrustes_from_stats(sum_p, sum_pp, cross, sum_g, V)
        rst = jnp.concatenate(
            [scale[..., None], R.reshape(bs, multi_n, 9), t,
             jnp.zeros((bs, multi_n, 3), F32)], axis=-1)  # [bs, mn, 16]
        pa_mpvpe = pa_point_error(pred_t, gt_t, rst)
        eval_result['pa_mpvpe_all'] = pa_mpvpe

        # PA-MPJPE over only 14 joints: tiny -> plain JAX (no kernel launch).
        joint_out = jnp.transpose(joint_out_cm, (0, 1, 3, 2))    # [bs,mn,J,3]
        joint_gt = jnp.transpose(joint_gt_cm, (0, 2, 1))         # [bs,J,3]
        joint_ra = batch_rigid_align(joint_out, joint_gt[:, None])
        pa_mpjpe_body = jnp.mean(jnp.sqrt(jnp.sum(
            (joint_ra - joint_gt[:, None]) ** 2, axis=-1)), axis=-1) * 1000.0
        eval_result['pa_mpjpe_body'] = pa_mpjpe_body

        # Fused rank + MSE losses (single pallas_call).
        score_raw_t = score_raw.reshape(bs, multi_n).astype(F32)
        score_t = score.reshape(bs, multi_n).astype(F32)
        metrics = jnp.stack([mpvpe, pa_mpvpe, mpjpe_body, pa_mpjpe_body], axis=0)
        # TODO(synk): argsort-based rank computation has no Pallas equivalent; done in JAX.
        ranks = jnp.argsort(jnp.argsort(-metrics, axis=-1), axis=-1).astype(F32)
        mask = jnp.ones((bs, 1), F32)

        losses = fused_rank_mse_loss(score_raw_t, score_t, ranks, metrics,
                                     mask, self.sigma)

        p_mppve = losses[0] * self.weight_mpvpe
        p_pa_mpvpe = losses[1] * self.weight_pa_mppve
        p_mpjpe_body = losses[2] * self.weight_mpjpe
        p_pa_mpjpe_body = losses[3] * self.weight_pa_mpjpe
        mse_mppve = losses[4] * self.weight_mpvpe_mse
        mse_pa_mpvpe = losses[5] * self.weight_pa_mppve_mse
        mse_mpjpe_body = losses[6] * self.weight_mpjpe_mse
        mse_pa_mpjpe_body = losses[7] * self.weight_pa_mpjpe_mse

        return (p_mppve, p_pa_mpvpe, p_mpjpe_body, p_pa_mpjpe_body,
                mse_mppve, mse_pa_mpvpe, mse_mpjpe_body, mse_pa_mpjpe_body,
                eval_result)


if __name__ == "__main__":
    key = jax.random.PRNGKey(0)
    bs, multi_n, V, n_joints, n_j14 = 2, 4, 64, 15, 14
    pelvis_idx = 0
    k1, k2, k3, k4, k5, k6 = jax.random.split(key, 6)

    # Deterministic synthetic SMPL-X regressors (rows sum to 1).
    j_reg = jax.nn.softmax(jax.random.normal(k1, (n_joints, V)), axis=-1).astype(F32)
    j14_reg = jax.nn.softmax(jax.random.normal(k2, (n_j14, V)), axis=-1).astype(F32)

    gt_mesh = (0.2 * jax.random.normal(k3, (bs, V, 3))).astype(F32)
    noise = (0.05 * jax.random.normal(k4, (bs * multi_n, V, 3))).astype(F32)
    out_mesh = jnp.repeat(gt_mesh, multi_n, axis=0) + noise

    score_raw = jax.random.normal(k5, (bs * multi_n,)).astype(F32)
    score = jax.nn.sigmoid(jax.random.normal(k6, (bs * multi_n,))).astype(F32)

    loss = ScoreLoss(j_reg, j14_reg, pelvis_idx)
    outs = loss(score_raw, score, {'mesh': out_mesh}, {'mesh': gt_mesh})
    outs = jax.block_until_ready(outs)
    print("KERNEL_OK")
</pallas_src>

<mosaic_0001>
module attributes {stable_mosaic.version = 11 : i64} {
  func.func @_metrics_kernel(%arg0: i32, %arg1: i32, %arg2: memref<3x1x4x64xf32, #tpu.memory_space<vmem>>, %arg3: memref<1x3x64xf32, #tpu.memory_space<vmem>>, %arg4: memref<64x15xf32, #tpu.memory_space<vmem>>, %arg5: memref<1x14xf32, #tpu.memory_space<vmem>>, %arg6: memref<1x4x128xf32, #tpu.memory_space<vmem>>) attributes {dimension_semantics = [#tpu.dimension_semantics<parallel>, #tpu.dimension_semantics<parallel>], iteration_bounds = array<i64: 2, 1>, scalar_prefetch = 0 : i64, scratch_operands = 0 : i64, tpu.core_type = #tpu.core_type<tc>, window_params = [{transform_indices = @transform_0, window_bounds = array<i64: 3, 1, 4, 64>}, {transform_indices = @transform_1, window_bounds = array<i64: 1, 3, 64>}, {pipeline_mode = #tpu.pipeline_mode<synchronous>, transform_indices = @transform_2, window_bounds = array<i64: 64, 15>}, {pipeline_mode = #tpu.pipeline_mode<synchronous>, transform_indices = @transform_3, window_bounds = array<i64: 1, 14>}, {transform_indices = @transform_4, window_bounds = array<i64: 1, 4, 128>}]} {
    %c0 = arith.constant 0 : index
    %c0_0 = arith.constant 0 : index
    %0 = vector.load %arg4[%c0, %c0_0] : memref<64x15xf32, #tpu.memory_space<vmem>>, vector<64x15xf32>
    %c0_1 = arith.constant 0 : index
    %c0_2 = arith.constant 0 : index
    %1 = vector.load %arg5[%c0_1, %c0_2] : memref<1x14xf32, #tpu.memory_space<vmem>>, vector<1x14xf32>
    %c0_3 = arith.constant 0 : index
    %c0_4 = arith.constant 0 : index
    %c0_5 = arith.constant 0 : index
    %c0_6 = arith.constant 0 : index
    %2 = vector.load %arg2[%c0_3, %c0_4, %c0_5, %c0_6] : memref<3x1x4x64xf32, #tpu.memory_space<vmem>>, vector<3x1x4x64xf32>
    %3 = vector.shape_cast %2 : vector<3x1x4x64xf32> to vector<3x4x64xf32>
    %c0_7 = arith.constant 0 : index
    %c0_8 = arith.constant 0 : index
    %c0_9 = arith.constant 0 : index
    %4 = vector.load %arg3[%c0_7, %c0_8, %c0_9] : memref<1x3x64xf32, #tpu.memory_space<vmem>>, vector<1x3x64xf32>
    %5 = vector.shape_cast %4 : vector<1x3x64xf32> to vector<3x64xf32>
    %6 = vector.extract_strided_slice %3 {offsets = [0, 0, 0], sizes = [1, 4, 64], strides = [1, 1, 1]} : vector<3x4x64xf32> to vector<1x4x64xf32>
    %7 = vector.shape_cast %6 : vector<1x4x64xf32> to vector<4x64xf32>
    %cst = arith.constant dense<0.000000e+00> : vector<4x15xf32>
    %8 = tpu.matmul %7, %0, %cst {dimension_numbers = #tpu.dot_dimension_numbers<[1], [0], [0], [1], [0, 0, 1, 1], [], []>} : vector<4x64xf32>, vector<64x15xf32>, vector<4x15xf32> -> vector<4x15xf32>
    %9 = vector.extract_strided_slice %3 {offsets = [1, 0, 0], sizes = [1, 4, 64], strides = [1, 1, 1]} : vector<3x4x64xf32> to vector<1x4x64xf32>
    %10 = vector.shape_cast %9 : vector<1x4x64xf32> to vector<4x64xf32>
    %cst_10 = arith.constant dense<0.000000e+00> : vector<4x15xf32>
    %11 = tpu.matmul %10, %0, %cst_10 {dimension_numbers = #tpu.dot_dimension_numbers<[1], [0], [0], [1], [0, 0, 1, 1], [], []>} : vector<4x64xf32>, vector<64x15xf32>, vector<4x15xf32> -> vector<4x15xf32>
    %12 = vector.extract_strided_slice %3 {offsets = [2, 0, 0], sizes = [1, 4, 64], strides = [1, 1, 1]} : vector<3x4x64xf32> to vector<1x4x64xf32>
    %13 = vector.shape_cast %12 : vector<1x4x64xf32> to vector<4x64xf32>
    %cst_11 = arith.constant dense<0.000000e+00> : vector<4x15xf32>
    %14 = tpu.matmul %13, %0, %cst_11 {dimension_numbers = #tpu.dot_dimension_numbers<[1], [0], [0], [1], [0, 0, 1, 1], [], []>} : vector<4x64xf32>, vector<64x15xf32>, vector<4x15xf32> -> vector<4x15xf32>
    %cst_12 = arith.constant dense<0.000000e+00> : vector<3x15xf32>
    %15 = tpu.matmul %5, %0, %cst_12 {dimension_numbers = #tpu.dot_dimension_numbers<[1], [0], [0], [1], [0, 0, 1, 1], [], []>} : vector<3x64xf32>, vector<64x15xf32>, vector<3x15xf32> -> vector<3x15xf32>
    %16 = vector.extract_strided_slice %3 {offsets = [0, 0, 0], sizes = [1, 4, 64], strides = [1, 1, 1]} : vector<3x4x64xf32> to vector<1x4x64xf32>
    %17 = vector.shape_cast %16 : vector<1x4x64xf32> to vector<4x64xf32>
    %18 = vector.extract_strided_slice %5 {offsets = [0, 0], sizes = [1, 64], strides = [1, 1]} : vector<3x64xf32> to vector<1x64xf32>
    %19 = vector.extract_strided_slice %8 {offsets = [0, 0], sizes = [4, 14], strides = [1, 1]} : vector<4x15xf32> to vector<4x14xf32>
    %20 = vector.extract_strided_slice %8 {offsets = [0, 14], sizes = [4, 1], strides = [1, 1]} : vector<4x15xf32> to vector<4x1xf32>
    %21 = vector.extract_strided_slice %15 {offsets = [0, 0], sizes = [1, 14], strides = [1, 1]} : vector<3x15xf32> to vector<1x14xf32>
    %22 = vector.extract_strided_slice %15 {offsets = [0, 14], sizes = [1, 1], strides = [1, 1]} : vector<3x15xf32> to vector<1x1xf32>
    %23 = vector.broadcast %22 : vector<1x1xf32> to vector<4x1xf32>
    %24 = arith.subf %23, %20 : vector<4x1xf32>
    %25 = vector.broadcast %24 : vector<4x1xf32> to vector<4x64xf32>
    %26 = arith.addf %17, %25 : vector<4x64xf32>
    %27 = vector.broadcast %18 : vector<1x64xf32> to vector<4x64xf32>
    %28 = arith.subf %26, %27 : vector<4x64xf32>
    %29 = arith.mulf %28, %28 : vector<4x64xf32>
    %30 = vector.broadcast %24 : vector<4x1xf32> to vector<4x14xf32>
    %31 = vector.broadcast %1 : vector<1x14xf32> to vector<4x14xf32>
    %32 = arith.mulf %30, %31 : vector<4x14xf32>
    %33 = arith.addf %19, %32 : vector<4x14xf32>
    %34 = vector.broadcast %21 : vector<1x14xf32> to vector<4x14xf32>
    %35 = arith.subf %33, %34 : vector<4x14xf32>
    %36 = arith.mulf %35, %35 : vector<4x14xf32>
    %37 = vector.shape_cast %21 : vector<1x14xf32> to vector<1x14xf32>
    %38 = vector.broadcast %37 : vector<1x14xf32> to vector<4x14xf32>
    %cst_13 = arith.constant dense<0.000000e+00> : vector<4xf32>
    %39 = vector.multi_reduction <add>, %17, %cst_13 [1] : vector<4x64xf32> to vector<4xf32>
    %40 = vector.shape_cast %39 : vector<4xf32> to vector<4x1xf32>
    %41 = arith.mulf %17, %17 : vector<4x64xf32>
    %cst_14 = arith.constant dense<0.000000e+00> : vector<4xf32>
    %42 = vector.multi_reduction <add>, %41, %cst_14 [1] : vector<4x64xf32> to vector<4xf32>
    %43 = vector.shape_cast %42 : vector<4xf32> to vector<4x1xf32>
    %cst_15 = arith.constant dense<0.000000e+00> : vector<1xf32>
    %44 = vector.multi_reduction <add>, %18, %cst_15 [1] : vector<1x64xf32> to vector<1xf32>
    %45 = vector.shape_cast %44 : vector<1xf32> to vector<1x1xf32>
    %46 = vector.shape_cast %45 : vector<1x1xf32> to vector<1x1xf32>
    %47 = vector.broadcast %46 : vector<1x1xf32> to vector<4x1xf32>
    %48 = vector.extract_strided_slice %5 {offsets = [0, 0], sizes = [1, 64], strides = [1, 1]} : vector<3x64xf32> to vector<1x64xf32>
    %49 = vector.broadcast %48 : vector<1x64xf32> to vector<4x64xf32>
    %50 = arith.mulf %17, %49 : vector<4x64xf32>
    %cst_16 = arith.constant dense<0.000000e+00> : vector<4xf32>
    %51 = vector.multi_reduction <add>, %50, %cst_16 [1] : vector<4x64xf32> to vector<4xf32>
    %52 = vector.shape_cast %51 : vector<4xf32> to vector<4x1xf32>
    %53 = vector.extract_strided_slice %5 {offsets = [1, 0], sizes = [1, 64], strides = [1, 1]} : vector<3x64xf32> to vector<1x64xf32>
    %54 = vector.broadcast %53 : vector<1x64xf32> to vector<4x64xf32>
    %55 = arith.mulf %17, %54 : vector<4x64xf32>
    %cst_17 = arith.constant dense<0.000000e+00> : vector<4xf32>
    %56 = vector.multi_reduction <add>, %55, %cst_17 [1] : vector<4x64xf32> to vector<4xf32>
    %57 = vector.shape_cast %56 : vector<4xf32> to vector<4x1xf32>
    %58 = vector.extract_strided_slice %5 {offsets = [2, 0], sizes = [1, 64], strides = [1, 1]} : vector<3x64xf32> to vector<1x64xf32>
    %59 = vector.broadcast %58 : vector<1x64xf32> to vector<4x64xf32>
    %60 = arith.mulf %17, %59 : vector<4x64xf32>
    %cst_18 = arith.constant dense<0.000000e+00> : vector<4xf32>
    %61 = vector.multi_reduction <add>, %60, %cst_18 [1] : vector<4x64xf32> to vector<4xf32>
    %62 = vector.shape_cast %61 : vector<4xf32> to vector<4x1xf32>
    %63 = vector.extract_strided_slice %3 {offsets = [1, 0, 0], sizes = [1, 4, 64], strides = [1, 1, 1]} : vector<3x4x64xf32> to vector<1x4x64xf32>
    %64 = vector.shape_cast %63 : vector<1x4x64xf32> to vector<4x64xf32>
    %65 = vector.extract_strided_slice %5 {offsets = [1, 0], sizes = [1, 64], strides = [1, 1]} : vector<3x64xf32> to vector<1x64xf32>
    %66 = vector.extract_strided_slice %11 {offsets = [0, 0], sizes = [4, 14], strides = [1, 1]} : vector<4x15xf32> to vector<4x14xf32>
    %67 = vector.extract_strided_slice %11 {offsets = [0, 14], sizes = [4, 1], strides = [1, 1]} : vector<4x15xf32> to vector<4x1xf32>
    %68 = vector.extract_strided_slice %15 {offsets = [1, 0], sizes = [1, 14], strides = [1, 1]} : vector<3x15xf32> to vector<1x14xf32>
    %69 = vector.extract_strided_slice %15 {offsets = [1, 14], sizes = [1, 1], strides = [1, 1]} : vector<3x15xf32> to vector<1x1xf32>
    %70 = vector.broadcast %69 : vector<1x1xf32> to vector<4x1xf32>
    %71 = arith.subf %70, %67 : vector<4x1xf32>
    %72 = vector.broadcast %71 : vector<4x1xf32> to vector<4x64xf32>
    %73 = arith.addf %64, %72 : vector<4x64xf32>
    %74 = vector.broadcast %65 : vector<1x64xf32> to vector<4x64xf32>
    %75 = arith.subf %73, %74 : vector<4x64xf32>
    %76 = arith.mulf %75, %75 : vector<4x64xf32>
    %77 = arith.addf %29, %76 : vector<4x64xf32>
    %78 = vector.broadcast %71 : vector<4x1xf32> to vector<4x14xf32>
    %79 = vector.broadcast %1 : vector<1x14xf32> to vector<4x14xf32>
    %80 = arith.mulf %78, %79 : vector<4x14xf32>
    %81 = arith.addf %66, %80 : vector<4x14xf32>
    %82 = vector.broadcast %68 : vector<1x14xf32> to vector<4x14xf32>
    %83 = arith.subf %81, %82 : vector<4x14xf32>
    %84 = arith.mulf %83, %83 : vector<4x14xf32>
    %85 = arith.addf %36, %84 : vector<4x14xf32>
    %86 = vector.shape_cast %68 : vector<1x14xf32> to vector<1x14xf32>
    %87 = vector.broadcast %86 : vector<1x14xf32> to vector<4x14xf32>
    %cst_19 = arith.constant dense<0.000000e+00> : vector<4xf32>
    %88 = vector.multi_reduction <add>, %64, %cst_19 [1] : vector<4x64xf32> to vector<4xf32>
    %89 = vector.shape_cast %88 : vector<4xf32> to vector<4x1xf32>
    %90 = arith.mulf %64, %64 : vector<4x64xf32>
    %cst_20 = arith.constant dense<0.000000e+00> : vector<4xf32>
    %91 = vector.multi_reduction <add>, %90, %cst_20 [1] : vector<4x64xf32> to vector<4xf32>
    %92 = vector.shape_cast %91 : vector<4xf32> to vector<4x1xf32>
    %93 = arith.addf %43, %92 : vector<4x1xf32>
    %cst_21 = arith.constant dense<0.000000e+00> : vector<1xf32>
    %94 = vector.multi_reduction <add>, %65, %cst_21 [1] : vector<1x64xf32> to vector<1xf32>
    %95 = vector.shape_cast %94 : vector<1xf32> to vector<1x1xf32>
    %96 = vector.shape_cast %95 : vector<1x1xf32> to vector<1x1xf32>
    %97 = vector.broadcast %96 : vector<1x1xf32> to vector<4x1xf32>
    %98 = vector.extract_strided_slice %5 {offsets = [0, 0], sizes = [1, 64], strides = [1, 1]} : vector<3x64xf32> to vector<1x64xf32>
    %99 = vector.broadcast %98 : vector<1x64xf32> to vector<4x64xf32>
    %100 = arith.mulf %64, %99 : vector<4x64xf32>
    %cst_22 = arith.constant dense<0.000000e+00> : vector<4xf32>
    %101 = vector.multi_reduction <add>, %100, %cst_22 [1] : vector<4x64xf32> to vector<4xf32>
    %102 = vector.shape_cast %101 : vector<4xf32> to vector<4x1xf32>
    %103 = vector.extract_strided_slice %5 {offsets = [1, 0], sizes = [1, 64], strides = [1, 1]} : vector<3x64xf32> to vector<1x64xf32>
    %104 = vector.broadcast %103 : vector<1x64xf32> to vector<4x64xf32>
    %105 = arith.mulf %64, %104 : vector<4x64xf32>
    %cst_23 = arith.constant dense<0.000000e+00> : vector<4xf32>
    %106 = vector.multi_reduction <add>, %105, %cst_23 [1] : vector<4x64xf32> to vector<4xf32>
    %107 = vector.shape_cast %106 : vector<4xf32> to vector<4x1xf32>
    %108 = vector.extract_strided_slice %5 {offsets = [2, 0], sizes = [1, 64], strides = [1, 1]} : vector<3x64xf32> to vector<1x64xf32>
    %109 = vector.broadcast %108 : vector<1x64xf32> to vector<4x64xf32>
    %110 = arith.mulf %64, %109 : vector<4x64xf32>
    %cst_24 = arith.constant dense<0.000000e+00> : vector<4xf32>
    %111 = vector.multi_reduction <add>, %110, %cst_24 [1] : vector<4x64xf32> to vector<4xf32>
    %112 = vector.shape_cast %111 : vector<4xf32> to vector<4x1xf32>
    %113 = vector.extract_strided_slice %3 {offsets = [2, 0, 0], sizes = [1, 4, 64], strides = [1, 1, 1]} : vector<3x4x64xf32> to vector<1x4x64xf32>
    %114 = vector.shape_cast %113 : vector<1x4x64xf32> to vector<4x64xf32>
    %115 = vector.extract_strided_slice %5 {offsets = [2, 0], sizes = [1, 64], strides = [1, 1]} : vector<3x64xf32> to vector<1x64xf32>
    %116 = vector.extract_strided_slice %14 {offsets = [0, 0], sizes = [4, 14], strides = [1, 1]} : vector<4x15xf32> to vector<4x14xf32>
    %117 = vector.extract_strided_slice %14 {offsets = [0, 14], sizes = [4, 1], strides = [1, 1]} : vector<4x15xf32> to vector<4x1xf32>
    %118 = vector.extract_strided_slice %15 {offsets = [2, 0], sizes = [1, 14], strides = [1, 1]} : vector<3x15xf32> to vector<1x14xf32>
    %119 = vector.extract_strided_slice %15 {offsets = [2, 14], sizes = [1, 1], strides = [1, 1]} : vector<3x15xf32> to vector<1x1xf32>
    %120 = vector.broadcast %119 : vector<1x1xf32> to vector<4x1xf32>
    %121 = arith.subf %120, %117 : vector<4x1xf32>
    %122 = vector.broadcast %121 : vector<4x1xf32> to vector<4x64xf32>
    %123 = arith.addf %114, %122 : vector<4x64xf32>
    %124 = vector.broadcast %115 : vector<1x64xf32> to vector<4x64xf32>
    %125 = arith.subf %123, %124 : vector<4x64xf32>
    %126 = arith.mulf %125, %125 : vector<4x64xf32>
    %127 = arith.addf %77, %126 : vector<4x64xf32>
    %128 = vector.broadcast %121 : vector<4x1xf32> to vector<4x14xf32>
    %129 = vector.broadcast %1 : vector<1x14xf32> to vector<4x14xf32>
    %130 = arith.mulf %128, %129 : vector<4x14xf32>
    %131 = arith.addf %116, %130 : vector<4x14xf32>
    %132 = vector.broadcast %118 : vector<1x14xf32> to vector<4x14xf32>
    %133 = arith.subf %131, %132 : vector<4x14xf32>
    %134 = arith.mulf %133, %133 : vector<4x14xf32>
    %135 = arith.addf %85, %134 : vector<4x14xf32>
    %136 = vector.shape_cast %118 : vector<1x14xf32> to vector<1x14xf32>
    %137 = vector.broadcast %136 : vector<1x14xf32> to vector<4x14xf32>
    %cst_25 = arith.constant dense<0.000000e+00> : vector<4xf32>
    %138 = vector.multi_reduction <add>, %114, %cst_25 [1] : vector<4x64xf32> to vector<4xf32>
    %139 = vector.shape_cast %138 : vector<4xf32> to vector<4x1xf32>
    %140 = arith.mulf %114, %114 : vector<4x64xf32>
    %cst_26 = arith.constant dense<0.000000e+00> : vector<4xf32>
    %141 = vector.multi_reduction <add>, %140, %cst_26 [1] : vector<4x64xf32> to vector<4xf32>
    %142 = vector.shape_cast %141 : vector<4xf32> to vector<4x1xf32>
    %143 = arith.addf %93, %142 : vector<4x1xf32>
    %cst_27 = arith.constant dense<0.000000e+00> : vector<1xf32>
    %144 = vector.multi_reduction <add>, %115, %cst_27 [1] : vector<1x64xf32> to vector<1xf32>
    %145 = vector.shape_cast %144 : vector<1xf32> to vector<1x1xf32>
    %146 = vector.shape_cast %145 : vector<1x1xf32> to vector<1x1xf32>
    %147 = vector.broadcast %146 : vector<1x1xf32> to vector<4x1xf32>
    %148 = vector.extract_strided_slice %5 {offsets = [0, 0], sizes = [1, 64], strides = [1, 1]} : vector<3x64xf32> to vector<1x64xf32>
    %149 = vector.broadcast %148 : vector<1x64xf32> to vector<4x64xf32>
    %150 = arith.mulf %114, %149 : vector<4x64xf32>
    %cst_28 = arith.constant dense<0.000000e+00> : vector<4xf32>
    %151 = vector.multi_reduction <add>, %150, %cst_28 [1] : vector<4x64xf32> to vector<4xf32>
    %152 = vector.shape_cast %151 : vector<4xf32> to vector<4x1xf32>
    %153 = vector.extract_strided_slice %5 {offsets = [1, 0], sizes = [1, 64], strides = [1, 1]} : vector<3x64xf32> to vector<1x64xf32>
    %154 = vector.broadcast %153 : vector<1x64xf32> to vector<4x64xf32>
    %155 = arith.mulf %114, %154 : vector<4x64xf32>
    %cst_29 = arith.constant dense<0.000000e+00> : vector<4xf32>
    %156 = vector.multi_reduction <add>, %155, %cst_29 [1] : vector<4x64xf32> to vector<4xf32>
    %157 = vector.shape_cast %156 : vector<4xf32> to vector<4x1xf32>
    %158 = vector.extract_strided_slice %5 {offsets = [2, 0], sizes = [1, 64], strides = [1, 1]} : vector<3x64xf32> to vector<1x64xf32>
    %159 = vector.broadcast %158 : vector<1x64xf32> to vector<4x64xf32>
    %160 = arith.mulf %114, %159 : vector<4x64xf32>
    %cst_30 = arith.constant dense<0.000000e+00> : vector<4xf32>
    %161 = vector.multi_reduction <add>, %160, %cst_30 [1] : vector<4x64xf32> to vector<4xf32>
    %162 = vector.shape_cast %161 : vector<4xf32> to vector<4x1xf32>
    %163 = math.sqrt %127 : vector<4x64xf32>
    %cst_31 = arith.constant dense<0.000000e+00> : vector<4xf32>
    %164 = vector.multi_reduction <add>, %163, %cst_31 [1] : vector<4x64xf32> to vector<4xf32>
    %165 = vector.shape_cast %164 : vector<4xf32> to vector<4x1xf32>
    %cst_32 = arith.constant 6.400000e+01 : f32
    %166 = vector.broadcast %cst_32 : f32 to vector<4x1xf32>
    %167 = arith.divf %165, %166 : vector<4x1xf32>
    %cst_33 = arith.constant 1.000000e+03 : f32
    %168 = vector.broadcast %cst_33 : f32 to vector<4x1xf32>
    %169 = arith.mulf %167, %168 : vector<4x1xf32>
    %170 = math.sqrt %135 : vector<4x14xf32>
    %cst_34 = arith.constant dense<0.000000e+00> : vector<4xf32>
    %171 = vector.multi_reduction <add>, %170, %cst_34 [1] : vector<4x14xf32> to vector<4xf32>
    %172 = vector.shape_cast %171 : vector<4xf32> to vector<4x1xf32>
    %cst_35 = arith.constant 1.400000e+01 : f32
    %173 = vector.broadcast %cst_35 : f32 to vector<4x1xf32>
    %174 = arith.divf %172, %173 : vector<4x1xf32>
    %cst_36 = arith.constant 1.000000e+03 : f32
    %175 = vector.broadcast %cst_36 : f32 to vector<4x1xf32>
    %176 = arith.mulf %174, %175 : vector<4x1xf32>
    %cst_37 = arith.constant 0.000000e+00 : f32
    %177 = vector.broadcast %cst_37 : f32 to vector<4x26xf32>
    %178 = tpu.concatenate %169, %176, %19, %66, %116, %38, %87, %137, %40, %89, %139, %143, %52, %57, %62, %102 in 1 : vector<4x1xf32>, vector<4x1xf32>, vector<4x14xf32>, vector<4x14xf32>, vector<4x14xf32>, vector<4x14xf32>, vector<4x14xf32>, vector<4x14xf32>, vector<4x1xf32>, vector<4x1xf32>, vector<4x1xf32>, vector<4x1xf32>, vector<4x1xf32>, vector<4x1xf32>, vector<4x1xf32>, vector<4x1xf32> -> vector<4x94xf32>
    %179 = tpu.concatenate %107, %112, %152, %157, %162, %47, %97, %147, %177 in 1 : vector<4x1xf32>, vector<4x1xf32>, vector<4x1xf32>, vector<4x1xf32>, vector<4x1xf32>, vector<4x1xf32>, vector<4x1xf32>, vector<4x1xf32>, vector<4x26xf32> -> vector<4x34xf32>
    %180 = tpu.concatenate %178, %179 in 1 : vector<4x94xf32>, vector<4x34xf32> -> vector<4x128xf32>
    %181 = vector.shape_cast %180 : vector<4x128xf32> to vector<1x4x128xf32>
    %c0_38 = arith.constant 0 : index
    %c0_39 = arith.constant 0 : index
    %c0_40 = arith.constant 0 : index
    %182 = vector.load %arg6[%c0_38, %c0_39, %c0_40] : memref<1x4x128xf32, #tpu.memory_space<vmem>>, vector<1x4x128xf32>
    tpu.vector_store %arg6[%c0_38, %c0_39, %c0_40], %181 {strides = array<i32>} : memref<1x4x128xf32, #tpu.memory_space<vmem>>, vector<1x4x128xf32>,
    return
  }
  func.func @transform_0(%arg0: i32, %arg1: i32) -> (i32, i32, i32, i32) {
    %c0_i32 = arith.constant 0 : i32
    %c0_i32_0 = arith.constant 0 : i32
    %c0_i32_1 = arith.constant 0 : i32
    return %c0_i32, %arg0, %arg1, %c0_i32_0 : i32, i32, i32, i32
  }
  func.func @transform_1(%arg0: i32, %arg1: i32) -> (i32, i32, i32) {
    %c0_i32 = arith.constant 0 : i32
    %c0_i32_0 = arith.constant 0 : i32
    %c0_i32_1 = arith.constant 0 : i32
    return %arg0, %c0_i32, %c0_i32_0 : i32, i32, i32
  }
  func.func @transform_2(%arg0: i32, %arg1: i32) -> (i32, i32) {
    %c0_i32 = arith.constant 0 : i32
    %c0_i32_0 = arith.constant 0 : i32
    %c0_i32_1 = arith.constant 0 : i32
    return %c0_i32, %c0_i32_0 : i32, i32
  }
  func.func @transform_3(%arg0: i32, %arg1: i32) -> (i32, i32) {
    %c0_i32 = arith.constant 0 : i32
    %c0_i32_0 = arith.constant 0 : i32
    %c0_i32_1 = arith.constant 0 : i32
    return %c0_i32, %c0_i32_0 : i32, i32
  }
  func.func @transform_4(%arg0: i32, %arg1: i32) -> (i32, i32, i32) {
    %c0_i32 = arith.constant 0 : i32
    %c0_i32_0 = arith.constant 0 : i32
    return %arg0, %arg1, %c0_i32 : i32, i32, i32
  }
}

</mosaic_0001>

<llo_original>
// kernel: tpu_custom_call.1
$region0: #{tpu_custom_call.1}
  #allocation0 [shape = 'u32[]', space=smem, size = 0x4, offset = 0x4, fixed_abs, tag = 'smem constant byte address 0x4 - core index']
  #allocation1 [shape = 'u32[144,128]{1,0:T(1,128)}', space=vmem, size = 0x12000, scoped, tag = 'internal scratch']
  %s0 = inlined_call_operand.vmem [shape: f32[3,2,4,64], index: 0, kind: input, shape index: {}]
  %s1 = inlined_call_operand.vmem [shape: f32[2,3,64], index: 1, kind: input, shape index: {}]
  %s2 = inlined_call_operand.vmem [shape: f32[64,15], index: 2, kind: input, shape index: {}]
  %s3 = inlined_call_operand.vmem [shape: f32[1,14], index: 3, kind: input, shape index: {}]
  %s4 = inlined_call_operand.hbm [shape: f32[2,4,128], index: 4, kind: output, shape index: {}]
  %s5 = sld [smem:[#allocation0]]
  $region90: #{tpu_custom_call.1} parent=0
    _
  %s7 = ssub.s32 1, %s5
  %s8 = scalar_select 0, %s7, %s5
  $region1: #{tpu_custom_call.1} parent=0
    #allocation2 [shape = 'u8[12288]{0}', space=vmem, size = 0x3000, scoped, tag = 'input window, operand 0']
    #allocation3 [shape = 'u8[4096]{0}', space=vmem, size = 0x1000, scoped, tag = 'output window, operand 0']
    #allocation4 [shape = 's32[2]{0}', space=sflag, size = 0x8, scoped, tag = 'scoped memory for tpu_custom_call.1']
    %9 = vsyncpa [#allocation4], 0
    %s10 = scalar_lea.sflag [#allocation4], 1
    %11 = vsyncpa %s10, 0
    loop: start=0, step=1, limit=4
    $region2: #{tpu_custom_call.1} parent=1 // loop_pre_header
      _
    $region3: #{tpu_custom_call.1} parent=1 // loop_header
      %s13 = sphi 0, %s17
      %p14 = scmp.ge.s32.totalorder %s13, 4
      %s20 = sphi 0, %s32
      %s21 = sphi 0, %s28
      %s22 = sphi 0, %s20
      %s23 = sphi 0, %s21
      %s24 = sphi 0, %s22
      %s25 = sphi 0, %s23
      %s37 = sphi 0, %s39
      %s40 = sphi 0, %s37
      %s41 = sphi 0, %s40
      %s57 = sphi 0, %s41
      %s63 = sphi 0, %s65
      %s66 = sphi 0, %s63
      %s67 = sphi 0, %s66
      %s83 = sphi 0, %s67
      %s87 = sphi 0, %s87
      %s89 = sphi 0, %s87
      %s90 = sphi 0, %s89
      %s104 = sphi 0, %s90
      %s108 = sphi 0, %s108
      %s110 = sphi 0, %s108
      %s111 = sphi 0, %s110
      %s125 = sphi 0, %s111
      %s133 = sphi 0, %s135
      %s136 = sphi 0, %s133
      %s137 = sphi 0, %s136
      %s153 = sphi 0, %s137
    $region4: #{tpu_custom_call.1} parent=1 // loop_header_branch
      %16 = sbr.rel (%p14) target = $region8
    $region5: #{tpu_custom_call.1} parent=1 // loop_body
      %s18 = ssub.s32 %s13, 1
      %s19 = ssub.s32 %s13, 2
      %s26 = sadd.s32 1, %s21
      %p27 = scmp.ge.s32.totalorder %s26, 1
      %s28 = scalar_select %p27, 0, %s26
      %s29 = sadd.s32 1, %s20
      %s30 = scalar_select %p27, %s29, %s20
      %p31 = scmp.ge.s32.totalorder %s30, 2
      %s32 = scalar_select %p31, 0, %s30
      %s33 = ssub.s32 %s20, %s32
      %s34 = ssub.s32 %s21, %s28
      %s35 = sor.u32 %s33, %s34
      %p36 = scmp.eq.s32.totalorder %s35, 0
      %s38 = sadd.s32 %s37, 1
      %s39 = scalar_select %p36, %s37, %s38
      %p42 = pneg %p36
      %p43 = scmp.eq.s32.totalorder %s13, 1
      %p44 = por %p42, %p43
      %p45 = scmp.ne.s32.totalorder %s37, %s40
      %p46 = scmp.eq.s32.totalorder %s13, 0
      %p47 = por %p45, %p46
      %p48 = scmp.ne.s32.totalorder %s37, %s40
      %p49 = scmp.eq.s32.totalorder %s18, 1
      %p50 = por %p48, %p49
      %p51 = scmp.ne.s32.totalorder %s40, %s41
      %p52 = scmp.eq.s32.totalorder %s18, 0
      %p53 = por %p51, %p52
      %p54 = scmp.ne.s32.totalorder %s40, %s41
      %p55 = scmp.eq.s32.totalorder %s19, 1
      %p56 = por %p54, %p55
      %p58 = scmp.ne.s32.totalorder %s41, %s57
      %p59 = scmp.eq.s32.totalorder %s19, 0
      %p60 = por %p58, %p59
      %s61 = ssub.s32 %s20, %s32
      %p62 = scmp.eq.s32.totalorder %s61, 0
      %s64 = sadd.s32 %s63, 1
      %s65 = scalar_select %p62, %s63, %s64
      %p68 = pneg %p62
      %p69 = scmp.eq.s32.totalorder %s13, 1
      %p70 = por %p68, %p69
      %p71 = scmp.ne.s32.totalorder %s63, %s66
      %p72 = scmp.eq.s32.totalorder %s13, 0
      %p73 = por %p71, %p72
      %p74 = scmp.ne.s32.totalorder %s63, %s66
      %p75 = scmp.eq.s32.totalorder %s18, 1
      %p76 = por %p74, %p75
      %p77 = scmp.ne.s32.totalorder %s66, %s67
      %p78 = scmp.eq.s32.totalorder %s18, 0
      %p79 = por %p77, %p78
      %p80 = scmp.ne.s32.totalorder %s66, %s67
      %p81 = scmp.eq.s32.totalorder %s19, 1
      %p82 = por %p80, %p81
      %p84 = scmp.ne.s32.totalorder %s67, %s83
      %p85 = scmp.eq.s32.totalorder %s19, 0
      %p86 = por %p84, %p85
      %s88 = sadd.s32 %s87, 1
      %p91 = scmp.eq.s32.totalorder %s13, 1
      %p92 = scmp.ne.s32.totalorder %s87, %s89
      %p93 = scmp.eq.s32.totalorder %s13, 0
      %p94 = por %p92, %p93
      %p95 = scmp.ne.s32.totalorder %s87, %s89
      %p96 = scmp.eq.s32.totalorder %s18, 1
      %p97 = por %p95, %p96
      %p98 = scmp.ne.s32.totalorder %s89, %s90
      %p99 = scmp.eq.s32.totalorder %s18, 0
      %p100 = por %p98, %p99
      %p101 = scmp.ne.s32.totalorder %s89, %s90
      %p102 = scmp.eq.s32.totalorder %s19, 1
      %p103 = por %p101, %p102
      %p105 = scmp.ne.s32.totalorder %s90, %s104
      %p106 = scmp.eq.s32.totalorder %s19, 0
      %p107 = por %p105, %p106
      %s109 = sadd.s32 %s108, 1
      %p112 = scmp.eq.s32.totalorder %s13, 1
      %p113 = scmp.ne.s32.totalorder %s108, %s110
      %p114 = scmp.eq.s32.totalorder %s13, 0
      %p115 = por %p113, %p114
      %p116 = scmp.ne.s32.totalorder %s108, %s110
      %p117 = scmp.eq.s32.totalorder %s18, 1
      %p118 = por %p116, %p117
      %p119 = scmp.ne.s32.totalorder %s110, %s111
      %p120 = scmp.eq.s32.totalorder %s18, 0
      %p121 = por %p119, %p120
      %p122 = scmp.ne.s32.totalorder %s110, %s111
      %p123 = scmp.eq.s32.totalorder %s19, 1
      %p124 = por %p122, %p123
      %p126 = scmp.ne.s32.totalorder %s111, %s125
      %p127 = scmp.eq.s32.totalorder %s19, 0
      %p128 = por %p126, %p127
      %s129 = ssub.s32 %s20, %s32
      %s130 = ssub.s32 %s21, %s28
      %s131 = sor.u32 %s129, %s130
      %p132 = scmp.eq.s32.totalorder %s131, 0
      %s134 = sadd.s32 %s133, 1
      %s135 = scalar_select %p132, %s133, %s134
      %p138 = pneg %p132
      %p139 = scmp.eq.s32.totalorder %s13, 1
      %p140 = por %p138, %p139
      %p141 = scmp.ne.s32.totalorder %s133, %s136
      %p142 = scmp.eq.s32.totalorder %s13, 0
      %p143 = por %p141, %p142
      %p144 = scmp.ne.s32.totalorder %s133, %s136
      %p145 = scmp.eq.s32.totalorder %s18, 1
      %p146 = por %p144, %p145
      %p147 = scmp.ne.s32.totalorder %s136, %s137
      %p148 = scmp.eq.s32.totalorder %s18, 0
      %p149 = por %p147, %p148
      %p150 = scmp.ne.s32.totalorder %s136, %s137
      %p151 = scmp.eq.s32.totalorder %s19, 1
      %p152 = por %p150, %p151
      %p154 = scmp.ne.s32.totalorder %s137, %s153
      %p155 = scmp.eq.s32.totalorder %s19, 0
      %p156 = por %p154, %p155
      %p157 = scmp.le.s32.totalorder 1, %s13
      %p158 = scmp.lt.s32.totalorder %s13, 3
      %p159 = pnand %p157, %p158
      %p160 = pneg %p159
      // Predicated region
      $region9: #{tpu_custom_call.1} parent=5 // pred_check
        _
      $region10: #{tpu_custom_call.1} parent=5 // pred_check_branch
        %162 = sbr.rel (%p159) target = $region12
      $region11: #{tpu_custom_call.1} parent=5 // pred_region
        %s163 = ssub.s32 %s13, 1
        // Predicated region
        $region13: #{tpu_custom_call.1} parent=11 // pred_check
          %p164 = pneg %p100
        $region14: #{tpu_custom_call.1} parent=11 // pred_check_branch
          %166 = sbr.rel (%p164) target = $region16
        $region15: #{tpu_custom_call.1} parent=11 // pred_region
          _
        $region16: #{tpu_custom_call.1} parent=11 // pred_fallthru
          _
        // Predicated region
        $region17: #{tpu_custom_call.1} parent=11 // pred_check
          %p167 = pneg %p121
        $region18: #{tpu_custom_call.1} parent=11 // pred_check_branch
          %169 = sbr.rel (%p167) target = $region20
        $region19: #{tpu_custom_call.1} parent=11 // pred_region
          _
        $region20: #{tpu_custom_call.1} parent=11 // pred_fallthru
          _
      $region12: #{tpu_custom_call.1} parent=5 // pred_fallthru
        _
      %p170 = scmp.lt.s32.totalorder %s13, 2
      // Predicated region
      $region21: #{tpu_custom_call.1} parent=5 // pred_check
        %p171 = pneg %p170
      $region22: #{tpu_custom_call.1} parent=5 // pred_check_branch
        %173 = sbr.rel (%p171) target = $region24
      $region23: #{tpu_custom_call.1} parent=5 // pred_region
        // Predicated region
        $region25: #{tpu_custom_call.1} parent=23 // pred_check
          %p174 = pneg %p47
        $region26: #{tpu_custom_call.1} parent=23 // pred_check_branch
          %176 = sbr.rel (%p174) target = $region28
        $region27: #{tpu_custom_call.1} parent=23 // pred_region
          %s177 = sand.u32 %s37, 1
          %s178 = sand.u32 %s37, 1
          %s179 = smul.addr %s178, 12
          %s180 = scalar_lea.vmem [#allocation2], %s179
          %s181 = sadd.s32 %s21, %s20
          %s182 = smul.addr %s181, 4
          %s183 = scalar_lea.vmem %s0, %s182
          // Predicated region
          $region29: #{tpu_custom_call.1} parent=27 // pred_check
            _
          $region30: #{tpu_custom_call.1} parent=27 // pred_check_branch
            %185 = sbr.rel (0) target = $region32
          $region31: #{tpu_custom_call.1} parent=27 // pred_region
            // Predicated region
            $region33: #{tpu_custom_call.1} parent=31 // pred_check
              _
            $region34: #{tpu_custom_call.1} parent=31 // pred_check_branch
              %187 = sbr.rel target = $region36
            $region35: #{tpu_custom_call.1} parent=31 // pred_region
              // Predicated region
              $region48: #{tpu_custom_call.1} parent=35 // pred_check
                _
              $region49: #{tpu_custom_call.1} parent=35 // pred_check_branch
                %207 = sbr.rel (0) target = $region51
              $region50: #{tpu_custom_call.1} parent=35 // pred_region
                loop: start=0, step=1, limit=1
                $region52: #{tpu_custom_call.1} parent=50 // loop_pre_header
                  _
                $region53: #{tpu_custom_call.1} parent=50 // loop_header
                  %s209 = sphi 0, %s213
                  %p210 = scmp.ge.s32.totalorder %s209, 1
                  %s214 = sphi %s183, %s183
                  %s215 = sphi %s180, %s180
                $region54: #{tpu_custom_call.1} parent=50 // loop_header_branch
                  %212 = sbr.rel (%p210) target = $region58
                $region55: #{tpu_custom_call.1} parent=50 // loop_body
                  _
                $region56: #{tpu_custom_call.1} parent=50 // loop_footer
                  %s213 = sadd.s32 1, %s209
                $region57: #{tpu_custom_call.1} parent=50 // loop_footer_branch
                  %208 = sbr.rel target = $region53
                $region58: #{tpu_custom_call.1} parent=50 // loop_exit
                  _
                %s217 = ssub.s32 16, 1
                loop: start=0, step=1, limit=1
                $region59: #{tpu_custom_call.1} parent=50 // loop_pre_header
                  _
                $region60: #{tpu_custom_call.1} parent=50 // loop_header
                  %s219 = sphi 0, %s223
                  %p220 = scmp.ge.s32.totalorder %s219, 1
                  %s224 = sphi %s183, %s183
                  %s225 = sphi %s180, %s180
                $region61: #{tpu_custom_call.1} parent=50 // loop_header_branch
                  %222 = sbr.rel (%p220) target = $region65
                $region62: #{tpu_custom_call.1} parent=50 // loop_body
                  %v226 = vld [vmem:[%s224] sm:%s217]
                  %227 = vst [vmem:[%s225] sm:%s217] %v226
                  %v228 = vld [vmem:[%s224 + $0x8] sm:%s217]
                  %229 = vst [vmem:[%s225 + $0x4] sm:%s217] %v228
                  %v230 = vld [vmem:[%s224 + $0x10] sm:%s217]
                  %231 = vst [vmem:[%s225 + $0x8] sm:%s217] %v230
                $region63: #{tpu_custom_call.1} parent=50 // loop_footer
                  %s223 = sadd.s32 1, %s219
                $region64: #{tpu_custom_call.1} parent=50 // loop_footer_branch
                  %218 = sbr.rel target = $region60
                $region65: #{tpu_custom_call.1} parent=50 // loop_exit
                  _
              $region51: #{tpu_custom_call.1} parent=35 // pred_fallthru
                _
            $region36: #{tpu_custom_call.1} parent=31 // pred_fallthru
              _
            // Predicated region
            $region37: #{tpu_custom_call.1} parent=31 // pred_check
              _
            $region38: #{tpu_custom_call.1} parent=31 // pred_check_branch
              %189 = sbr.rel (0) target = $region40
            $region39: #{tpu_custom_call.1} parent=31 // pred_region
              %s191 = ssub.s32 16, 1
              loop: start=0, step=1, limit=1
              $region41: #{tpu_custom_call.1} parent=39 // loop_pre_header
                _
              $region42: #{tpu_custom_call.1} parent=39 // loop_header
                %s193 = sphi 0, %s197
                %p194 = scmp.ge.s32.totalorder %s193, 1
                %s198 = sphi %s183, %s183
                %s199 = sphi %s180, %s180
              $region43: #{tpu_custom_call.1} parent=39 // loop_header_branch
                %196 = sbr.rel (%p194) target = $region47
              $region44: #{tpu_custom_call.1} parent=39 // loop_body
                %v200 = vld [vmem:[%s198] sm:%s191]
                %201 = vst [vmem:[%s199] sm:%s191] %v200
                %v202 = vld [vmem:[%s198 + $0x8] sm:%s191]
                %203 = vst [vmem:[%s199 + $0x4] sm:%s191] %v202
                %v204 = vld [vmem:[%s198 + $0x10] sm:%s191]
                %205 = vst [vmem:[%s199 + $0x8] sm:%s191] %v204
              $region45: #{tpu_custom_call.1} parent=39 // loop_footer
                %s197 = sadd.s32 1, %s193
              $region46: #{tpu_custom_call.1} parent=39 // loop_footer_branch
                %192 = sbr.rel target = $region42
              $region47: #{tpu_custom_call.1} parent=39 // loop_exit
                _
            $region40: #{tpu_custom_call.1} parent=31 // pred_fallthru
              _
          $region32: #{tpu_custom_call.1} parent=27 // pred_fallthru
            _
          %232 = vnop
        $region28: #{tpu_custom_call.1} parent=23 // pred_fallthru
          _
        // Predicated region
        $region66: #{tpu_custom_call.1} parent=23 // pred_check
          %p233 = pneg %p73
        $region67: #{tpu_custom_call.1} parent=23 // pred_check_branch
          %235 = sbr.rel (%p233) target = $region69
        $region68: #{tpu_custom_call.1} parent=23 // pred_region
          %p236 = scmp.lt.s32.totalorder %s20, 1
          %s237 = scalar_select %p236, %s20, 1
          %s238 = smul.addr %s237, 4
          %s239 = scalar_lea.vmem %s1, %s238
        $region69: #{tpu_custom_call.1} parent=23 // pred_fallthru
          _
      $region24: #{tpu_custom_call.1} parent=5 // pred_fallthru
        _
      %p240 = scmp.le.s32.totalorder 1, %s13
      %p241 = scmp.lt.s32.totalorder %s13, 3
      %p242 = pnand %p240, %p241
      %p243 = pneg %p242
      // Predicated region
      $region70: #{tpu_custom_call.1} parent=5 // pred_check
        _
      $region71: #{tpu_custom_call.1} parent=5 // pred_check_branch
        %245 = sbr.rel (%p242) target = $region73
      $region72: #{tpu_custom_call.1} parent=5 // pred_region
        %s246 = ssub.s32 %s13, 1
        %s247 = sand.u32 %s40, 1
        %s248 = sand.u32 %s40, 1
        %s249 = smul.addr %s248, 12
        %s250 = scalar_lea.vmem [#allocation2], %s249
        // Predicated region
        $region74: #{tpu_custom_call.1} parent=72 // pred_check
          %p251 = pneg %p53
        $region75: #{tpu_custom_call.1} parent=72 // pred_check_branch
          %253 = sbr.rel (%p251) target = $region77
        $region76: #{tpu_custom_call.1} parent=72 // pred_region
          _
        $region77: #{tpu_custom_call.1} parent=72 // pred_fallthru
          _
        %s254 = sand.u32 %s40, 1
        %s255 = sand.u32 %s40, 1
        %s256 = smul.addr %s255, 12
        %s257 = scalar_lea.vmem [#allocation2], %s256
        %p258 = pneg %p53
        %p259 = pneg %p50
        %p260 = scmp.lt.s32.totalorder %s22, 1
        %s261 = scalar_select %p260, %s22, 1
        %s262 = smul.addr %s261, 4
        %s263 = scalar_lea.vmem %s1, %s262
        %p264 = pneg %p79
        %p265 = pneg %p76
        %p266 = pneg %p100
        %p267 = pneg %p97
        %p268 = pneg %p121
        %p269 = pneg %p118
        %p270 = pneg %p149
        %p271 = pneg %p146
        %s272 = sand.u32 %s136, 1
        %s273 = scalar_lea.sflag [#allocation4], %s272
        %s274 = sand.u32 %s136, 1
        %s275 = smul.addr %s274, 4
        %s276 = scalar_lea.vmem [#allocation3], %s275
        %p277 = scmp.lt.s32.totalorder %s22, 1
        %s278 = scalar_select %p277, %s22, 1
        %s279 = smul.addr %s278, 4
        %s280 = scalar_lea.vmem %s1, %s279
        %v281 = vld [vmem:[%s2] sm:$0xff]
        %v282 = vld [vmem:[%s2 + $0x8] sm:$0xff]
        %v283 = vld [vmem:[%s2 + $0x10] sm:$0xff]
        %v284 = vld [vmem:[%s2 + $0x18] sm:$0xff]
        %v285 = vld [vmem:[%s2 + $0x20] sm:$0xff]
        %v286 = vld [vmem:[%s2 + $0x28] sm:$0xff]
        %v287 = vld [vmem:[%s2 + $0x30] sm:$0xff]
        %v288 = vld [vmem:[%s2 + $0x38] sm:$0xff]
        %v289 = vld [vmem:[%s3] sm:$0x1]
        %v290 = vld [vmem:[%s250] sm:$0xf]
        %v291 = vld [vmem:[%s250 + $0x4] sm:$0xf]
        %v292 = vld [vmem:[%s250 + $0x8] sm:$0xf]
        %v293 = vld [vmem:[%s280] sm:$0x7]
        %vm294 = vcmask 523264
        %v296 = vsel %vm294, %v290, 0
        %298 = vmatprep.subr.mxu0 0.0
        %299 = vmatpush1.msra.mxu0 0.0
        %300 = vmatprep.subr.mxu0 0.0
        %301 = vmatpush1.msra.mxu0 0.0
        %302 = vmatprep.subr.mxu0 0.0
        %303 = vmatpush1.msra.mxu0 0.0
        %304 = vmatprep.subr.mxu0 0.0
        %305 = vmatpush1.msra.mxu0 0.0
        %306 = vmatprep.subr.mxu0 0.0
        %307 = vmatpush1.msra.mxu0 0.0
        %308 = vmatprep.subr.mxu0 0.0
        %309 = vmatpush1.msra.mxu0 0.0
        %310 = vmatprep.subr.mxu0 0.0
        %311 = vmatpush1.msra.mxu0 0.0
        %312 = vmatprep.subr.mxu0 0.0
        %313 = vmatpush1.msra.mxu0 0.0
        %314 = vmatprep.subr.mxu0 0.0
        %315 = vmatpush1.msra.mxu0 %v288
        %316 = vmatprep.subr.mxu0 0.0
        %317 = vmatpush1.msra.mxu0 %v287
        %318 = vmatprep.subr.mxu0 0.0
        %319 = vmatpush1.msra.mxu0 %v286
        %320 = vmatprep.subr.mxu0 0.0
        %321 = vmatpush1.msra.mxu0 %v285
        %322 = vmatprep.subr.mxu0 0.0
        %323 = vmatpush1.msra.mxu0 %v284
        %324 = vmatprep.subr.mxu0 0.0
        %325 = vmatpush1.msra.mxu0 %v283
        %326 = vmatprep.subr.mxu0 0.0
        %327 = vmatpush1.msra.mxu0 %v282
        %328 = vmatprep.subr.mxu0 0.0
        %329 = vmatpush1.msra.mxu0 %v281
        %330 = vmatprep.subr.mxu0 0.0
        %331 = vmatpush2.msra.mxu0 0.0
        %332 = vmatprep.subr.mxu0 0.0
        %333 = vmatpush2.msra.mxu0 0.0
        %334 = vmatprep.subr.mxu0 0.0
        %335 = vmatpush2.msra.mxu0 0.0
        %336 = vmatprep.subr.mxu0 0.0
        %337 = vmatpush2.msra.mxu0 0.0
        %338 = vmatprep.subr.mxu0 0.0
        %339 = vmatpush2.msra.mxu0 0.0
        %340 = vmatprep.subr.mxu0 0.0
        %341 = vmatpush2.msra.mxu0 0.0
        %342 = vmatprep.subr.mxu0 0.0
        %343 = vmatpush2.msra.mxu0 0.0
        %344 = vmatprep.subr.mxu0 0.0
        %345 = vmatpush2.msra.mxu0 0.0
        %346 = vmatprep.subr.mxu0 0.0
        %347 = vmatpush2.msra.mxu0 0.0
        %348 = vmatprep.subr.mxu0 0.0
        %349 = vmatpush2.msra.mxu0 0.0
        %350 = vmatprep.subr.mxu0 0.0
        %351 = vmatpush2.msra.mxu0 0.0
        %352 = vmatprep.subr.mxu0 0.0
        %353 = vmatpush2.msra.mxu0 0.0
        %354 = vmatprep.subr.mxu0 0.0
        %355 = vmatpush2.msra.mxu0 0.0
        %356 = vmatprep.subr.mxu0 0.0
        %357 = vmatpush2.msra.mxu0 0.0
        %358 = vmatprep.subr.mxu0 0.0
        %359 = vmatpush2.msra.mxu0 0.0
        %360 = vmatprep.subr.mxu0 0.0
        %361 = vmatpush2.msra.mxu0 0.0
        %362 = vmatprep.mubr.f32.mxu0 0.0
        %363 = vmatmul.mubr.f32.gmra.mxu0 %v296
        %v364 = vpop.f32.mrf.mxu0
        %v365 = vadd.f32 0.0, %v364
        %v366 = vpop.f32.mrf.mxu0
        %367 = vdwg.mxu0
        %v369 = vsel %vm294, %v291, 0
        %371 = vmatprep.subr.mxu0 0.0
        %372 = vmatpush1.msra.mxu0 0.0
        %373 = vmatprep.subr.mxu0 0.0
        %374 = vmatpush1.msra.mxu0 0.0
        %375 = vmatprep.subr.mxu0 0.0
        %376 = vmatpush1.msra.mxu0 0.0
        %377 = vmatprep.subr.mxu0 0.0
        %378 = vmatpush1.msra.mxu0 0.0
        %379 = vmatprep.subr.mxu0 0.0
        %380 = vmatpush1.msra.mxu0 0.0
        %381 = vmatprep.subr.mxu0 0.0
        %382 = vmatpush1.msra.mxu0 0.0
        %383 = vmatprep.subr.mxu0 0.0
        %384 = vmatpush1.msra.mxu0 0.0
        %385 = vmatprep.subr.mxu0 0.0
        %386 = vmatpush1.msra.mxu0 0.0
        %387 = vmatprep.subr.mxu0 0.0
        %388 = vmatpush1.msra.mxu0 %v288
        %389 = vmatprep.subr.mxu0 0.0
        %390 = vmatpush1.msra.mxu0 %v287
        %391 = vmatprep.subr.mxu0 0.0
        %392 = vmatpush1.msra.mxu0 %v286
        %393 = vmatprep.subr.mxu0 0.0
        %394 = vmatpush1.msra.mxu0 %v285
        %395 = vmatprep.subr.mxu0 0.0
        %396 = vmatpush1.msra.mxu0 %v284
        %397 = vmatprep.subr.mxu0 0.0
        %398 = vmatpush1.msra.mxu0 %v283
        %399 = vmatprep.subr.mxu0 0.0
        %400 = vmatpush1.msra.mxu0 %v282
        %401 = vmatprep.subr.mxu0 0.0
        %402 = vmatpush1.msra.mxu0 %v281
        %403 = vmatprep.subr.mxu0 0.0
        %404 = vmatpush2.msra.mxu0 0.0
        %405 = vmatprep.subr.mxu0 0.0
        %406 = vmatpush2.msra.mxu0 0.0
        %407 = vmatprep.subr.mxu0 0.0
        %408 = vmatpush2.msra.mxu0 0.0
        %409 = vmatprep.subr.mxu0 0.0
        %410 = vmatpush2.msra.mxu0 0.0
        %411 = vmatprep.subr.mxu0 0.0
        %412 = vmatpush2.msra.mxu0 0.0
        %413 = vmatprep.subr.mxu0 0.0
        %414 = vmatpush2.msra.mxu0 0.0
        %415 = vmatprep.subr.mxu0 0.0
        %416 = vmatpush2.msra.mxu0 0.0
        %417 = vmatprep.subr.mxu0 0.0
        %418 = vmatpush2.msra.mxu0 0.0
        %419 = vmatprep.subr.mxu0 0.0
        %420 = vmatpush2.msra.mxu0 0.0
        %421 = vmatprep.subr.mxu0 0.0
        %422 = vmatpush2.msra.mxu0 0.0
        %423 = vmatprep.subr.mxu0 0.0
        %424 = vmatpush2.msra.mxu0 0.0
        %425 = vmatprep.subr.mxu0 0.0
        %426 = vmatpush2.msra.mxu0 0.0
        %427 = vmatprep.subr.mxu0 0.0
        %428 = vmatpush2.msra.mxu0 0.0
        %429 = vmatprep.subr.mxu0 0.0
        %430 = vmatpush2.msra.mxu0 0.0
        %431 = vmatprep.subr.mxu0 0.0
        %432 = vmatpush2.msra.mxu0 0.0
        %433 = vmatprep.subr.mxu0 0.0
        %434 = vmatpush2.msra.mxu0 0.0
        %435 = vmatprep.mubr.f32.mxu0 0.0
        %436 = vmatmul.mubr.f32.gmra.mxu0 %v369
        %v437 = vpop.f32.mrf.mxu0
        %v438 = vadd.f32 0.0, %v437
        %v439 = vpop.f32.mrf.mxu0
        %440 = vdwg.mxu0
        %v442 = vsel %vm294, %v292, 0
        %444 = vmatprep.subr.mxu0 0.0
        %445 = vmatpush1.msra.mxu0 0.0
        %446 = vmatprep.subr.mxu0 0.0
        %447 = vmatpush1.msra.mxu0 0.0
        %448 = vmatprep.subr.mxu0 0.0
        %449 = vmatpush1.msra.mxu0 0.0
        %450 = vmatprep.subr.mxu0 0.0
        %451 = vmatpush1.msra.mxu0 0.0
        %452 = vmatprep.subr.mxu0 0.0
        %453 = vmatpush1.msra.mxu0 0.0
        %454 = vmatprep.subr.mxu0 0.0
        %455 = vmatpush1.msra.mxu0 0.0
        %456 = vmatprep.subr.mxu0 0.0
        %457 = vmatpush1.msra.mxu0 0.0
        %458 = vmatprep.subr.mxu0 0.0
        %459 = vmatpush1.msra.mxu0 0.0
        %460 = vmatprep.subr.mxu0 0.0
        %461 = vmatpush1.msra.mxu0 %v288
        %462 = vmatprep.subr.mxu0 0.0
        %463 = vmatpush1.msra.mxu0 %v287
        %464 = vmatprep.subr.mxu0 0.0
        %465 = vmatpush1.msra.mxu0 %v286
        %466 = vmatprep.subr.mxu0 0.0
        %467 = vmatpush1.msra.mxu0 %v285
        %468 = vmatprep.subr.mxu0 0.0
        %469 = vmatpush1.msra.mxu0 %v284
        %470 = vmatprep.subr.mxu0 0.0
        %471 = vmatpush1.msra.mxu0 %v283
        %472 = vmatprep.subr.mxu0 0.0
        %473 = vmatpush1.msra.mxu0 %v282
        %474 = vmatprep.subr.mxu0 0.0
        %475 = vmatpush1.msra.mxu0 %v281
        %476 = vmatprep.subr.mxu0 0.0
        %477 = vmatpush2.msra.mxu0 0.0
        %478 = vmatprep.subr.mxu0 0.0
        %479 = vmatpush2.msra.mxu0 0.0
        %480 = vmatprep.subr.mxu0 0.0
        %481 = vmatpush2.msra.mxu0 0.0
        %482 = vmatprep.subr.mxu0 0.0
        %483 = vmatpush2.msra.mxu0 0.0
        %484 = vmatprep.subr.mxu0 0.0
        %485 = vmatpush2.msra.mxu0 0.0
        %486 = vmatprep.subr.mxu0 0.0
        %487 = vmatpush2.msra.mxu0 0.0
        %488 = vmatprep.subr.mxu0 0.0
        %489 = vmatpush2.msra.mxu0 0.0
        %490 = vmatprep.subr.mxu0 0.0
        %491 = vmatpush2.msra.mxu0 0.0
        %492 = vmatprep.subr.mxu0 0.0
        %493 = vmatpush2.msra.mxu0 0.0
        %494 = vmatprep.subr.mxu0 0.0
        %495 = vmatpush2.msra.mxu0 0.0
        %496 = vmatprep.subr.mxu0 0.0
        %497 = vmatpush2.msra.mxu0 0.0
        %498 = vmatprep.subr.mxu0 0.0
        %499 = vmatpush2.msra.mxu0 0.0
        %500 = vmatprep.subr.mxu0 0.0
        %501 = vmatpush2.msra.mxu0 0.0
        %502 = vmatprep.subr.mxu0 0.0
        %503 = vmatpush2.msra.mxu0 0.0
        %504 = vmatprep.subr.mxu0 0.0
        %505 = vmatpush2.msra.mxu0 0.0
        %506 = vmatprep.subr.mxu0 0.0
        %507 = vmatpush2.msra.mxu0 0.0
        %508 = vmatprep.mubr.f32.mxu0 0.0
        %509 = vmatmul.mubr.f32.gmra.mxu0 %v442
        %v510 = vpop.f32.mrf.mxu0
        %v511 = vadd.f32 0.0, %v510
        %v512 = vpop.f32.mrf.mxu0
        %513 = vdwg.mxu0
        %v515 = vsel %vm294, %v293, 0
        %517 = vmatprep.subr.mxu0 0.0
        %518 = vmatpush1.msra.mxu0 0.0
        %519 = vmatprep.subr.mxu0 0.0
        %520 = vmatpush1.msra.mxu0 0.0
        %521 = vmatprep.subr.mxu0 0.0
        %522 = vmatpush1.msra.mxu0 0.0
        %523 = vmatprep.subr.mxu0 0.0
        %524 = vmatpush1.msra.mxu0 0.0
        %525 = vmatprep.subr.mxu0 0.0
        %526 = vmatpush1.msra.mxu0 0.0
        %527 = vmatprep.subr.mxu0 0.0
        %528 = vmatpush1.msra.mxu0 0.0
        %529 = vmatprep.subr.mxu0 0.0
        %530 = vmatpush1.msra.mxu0 0.0
        %531 = vmatprep.subr.mxu0 0.0
        %532 = vmatpush1.msra.mxu0 0.0
        %533 = vmatprep.subr.mxu0 0.0
        %534 = vmatpush1.msra.mxu0 %v288
        %535 = vmatprep.subr.mxu0 0.0
        %536 = vmatpush1.msra.mxu0 %v287
        %537 = vmatprep.subr.mxu0 0.0
        %538 = vmatpush1.msra.mxu0 %v286
        %539 = vmatprep.subr.mxu0 0.0
        %540 = vmatpush1.msra.mxu0 %v285
        %541 = vmatprep.subr.mxu0 0.0
        %542 = vmatpush1.msra.mxu0 %v284
        %543 = vmatprep.subr.mxu0 0.0
        %544 = vmatpush1.msra.mxu0 %v283
        %545 = vmatprep.subr.mxu0 0.0
        %546 = vmatpush1.msra.mxu0 %v282
        %547 = vmatprep.subr.mxu0 0.0
        %548 = vmatpush1.msra.mxu0 %v281
        %549 = vmatprep.subr.mxu0 0.0
        %550 = vmatpush2.msra.mxu0 0.0
        %551 = vmatprep.subr.mxu0 0.0
        %552 = vmatpush2.msra.mxu0 0.0
        %553 = vmatprep.subr.mxu0 0.0
        %554 = vmatpush2.msra.mxu0 0.0
        %555 = vmatprep.subr.mxu0 0.0
        %556 = vmatpush2.msra.mxu0 0.0
        %557 = vmatprep.subr.mxu0 0.0
        %558 = vmatpush2.msra.mxu0 0.0
        %559 = vmatprep.subr.mxu0 0.0
        %560 = vmatpush2.msra.mxu0 0.0
        %561 = vmatprep.subr.mxu0 0.0
        %562 = vmatpush2.msra.mxu0 0.0
        %563 = vmatprep.subr.mxu0 0.0
        %564 = vmatpush2.msra.mxu0 0.0
        %565 = vmatprep.subr.mxu0 0.0
        %566 = vmatpush2.msra.mxu0 0.0
        %567 = vmatprep.subr.mxu0 0.0
        %568 = vmatpush2.msra.mxu0 0.0
        %569 = vmatprep.subr.mxu0 0.0
        %570 = vmatpush2.msra.mxu0 0.0
        %571 = vmatprep.subr.mxu0 0.0
        %572 = vmatpush2.msra.mxu0 0.0
        %573 = vmatprep.subr.mxu0 0.0
        %574 = vmatpush2.msra.mxu0 0.0
        %575 = vmatprep.subr.mxu0 0.0
        %576 = vmatpush2.msra.mxu0 0.0
        %577 = vmatprep.subr.mxu0 0.0
        %578 = vmatpush2.msra.mxu0 0.0
        %579 = vmatprep.subr.mxu0 0.0
        %580 = vmatpush2.msra.mxu0 0.0
        %581 = vmatprep.mubr.f32.mxu0 0.0
        %582 = vmatmul.mubr.f32.gmra.mxu0 %v515
        %v583 = vpop.f32.mrf.mxu0
        %v584 = vadd.f32 0.0, %v583
        %v585 = vpop.f32.mrf.mxu0
        %586 = vdwg.mxu0
        %v587 = vlaneseq
        %v588 = vshrl.u32 %v587, 7
        %v589 = vsub.s32 0, %v588
        %v590 = vrot.slane %v584, %v589
        %v591 = vsub.f32 %v590, %v365
        %593 = vset.pattern.permute.xlu0 14
        %594 = vperm.xlu0 %593, %v591
        %v595 = vpop.permute.xlu0 %594
        %v597 = vadd.f32 %v290, %v595
        %v598 = vlaneseq
        %v599 = vshrl.u32 %v598, 7
        %v600 = vsub.s32 0, %v599
        %v601 = vrot.slane %v293, %v600
        %v602 = vsub.f32 %v597, %v601
        %v603 = vmul.f32 %v602, %v602
        %v605 = vlaneseq
        %v606 = vshrl.u32 %v605, 7
        %v607 = vsub.s32 0, %v606
        %v608 = vrot.slane %v289, %v607
        %v610 = vmul.f32 %v595, %v608
        %v611 = vadd.f32 %v365, %v610
        %v612 = vsub.f32 %v611, %v590
        %v613 = vmul.f32 %v612, %v612
        %vm614 = vcmask 519168
        %v615 = vsel %vm614, %v290, 0.0
        %616 = vadd.xlane.f32.xlu0 %v615
        %v617 = vpop.xlane.xlu0 %616
        %v618 = vmul.f32 %v290, %v290
        %v619 = vsel %vm614, %v618, 0.0
        %620 = vadd.xlane.f32.xlu0 %v619
        %v621 = vpop.xlane.xlu0 %620
        %vm622 = vcmask 516096
        %v623 = vsel %vm622, %v293, 0.0
        %624 = vadd.xlane.f32.xlu0 %v623
        %v625 = vpop.xlane.xlu0 %624
        %v626 = vlaneseq
        %v627 = vshrl.u32 %v626, 7
        %v628 = vsub.s32 0, %v627
        %v629 = vrot.slane %v625, %v628
        %v630 = vmul.f32 %v290, %v601
        %v631 = vsel %vm614, %v630, 0.0
        %632 = vadd.xlane.f32.xlu0 %v631
        %v633 = vpop.xlane.xlu0 %632
        %v634 = vlaneseq
        %v635 = vshrl.u32 %v634, 7
        %v636 = vsub.s32 1, %v635
        %v637 = vrot.slane %v293, %v636
        %v638 = vmul.f32 %v290, %v637
        %v639 = vsel %vm614, %v638, 0.0
        %640 = vadd.xlane.f32.xlu0 %v639
        %v641 = vpop.xlane.xlu0 %640
        %v642 = vlaneseq
        %v643 = vshrl.u32 %v642, 7
        %v644 = vsub.s32 2, %v643
        %v645 = vrot.slane %v293, %v644
        %v646 = vmul.f32 %v290, %v645
        %v647 = vsel %vm614, %v646, 0.0
        %648 = vadd.xlane.f32.xlu0 %v647
        %v649 = vpop.xlane.xlu0 %648
        %v650 = vlaneseq
        %v651 = vshrl.u32 %v650, 7
        %v652 = vsub.s32 1, %v651
        %v653 = vrot.slane %v584, %v652
        %v654 = vsub.f32 %v653, %v438
        %656 = vset.pattern.permute.xlu0 14
        %657 = vperm.xlu0 %656, %v654
        %v658 = vpop.permute.xlu0 %657
        %v660 = vadd.f32 %v291, %v658
        %v661 = vsub.f32 %v660, %v637
        %v662 = vmul.f32 %v661, %v661
        %v663 = vadd.f32 %v603, %v662
        %v664 = vmul.f32 %v658, %v608
        %v665 = vadd.f32 %v438, %v664
        %v666 = vsub.f32 %v665, %v653
        %v667 = vmul.f32 %v666, %v666
        %v668 = vadd.f32 %v613, %v667
        %v669 = vsel %vm614, %v291, 0.0
        %670 = vadd.xlane.f32.xlu0 %v669
        %v671 = vpop.xlane.xlu0 %670
        %v672 = vmul.f32 %v291, %v291
        %v673 = vsel %vm614, %v672, 0.0
        %674 = vadd.xlane.f32.xlu0 %v673
        %v675 = vpop.xlane.xlu0 %674
        %v676 = vadd.f32 %v621, %v675
        %vm677 = vcmask 517121
        %v678 = vsel %vm677, %v293, 0.0
        %679 = vadd.xlane.f32.xlu0 %v678
        %v680 = vpop.xlane.xlu0 %679
        %v681 = vlaneseq
        %v682 = vshrl.u32 %v681, 7
        %v683 = vsub.s32 1, %v682
        %v684 = vrot.slane %v680, %v683
        %v685 = vmul.f32 %v291, %v601
        %v686 = vsel %vm614, %v685, 0.0
        %687 = vadd.xlane.f32.xlu0 %v686
        %v688 = vpop.xlane.xlu0 %687
        %v689 = vmul.f32 %v291, %v637
        %v690 = vsel %vm614, %v689, 0.0
        %691 = vadd.xlane.f32.xlu0 %v690
        %v692 = vpop.xlane.xlu0 %691
        %v693 = vmul.f32 %v291, %v645
        %v694 = vsel %vm614, %v693, 0.0
        %695 = vadd.xlane.f32.xlu0 %v694
        %v696 = vpop.xlane.xlu0 %695
        %v697 = vlaneseq
        %v698 = vshrl.u32 %v697, 7
        %v699 = vsub.s32 2, %v698
        %v700 = vrot.slane %v584, %v699
        %v701 = vsub.f32 %v700, %v511
        %703 = vset.pattern.permute.xlu0 14
        %704 = vperm.xlu0 %703, %v701
        %v705 = vpop.permute.xlu0 %704
        %v707 = vadd.f32 %v292, %v705
        %v708 = vsub.f32 %v707, %v645
        %v709 = vmul.f32 %v708, %v708
        %v710 = vadd.f32 %v663, %v709
        %v711 = vmul.f32 %v705, %v608
        %v712 = vadd.f32 %v511, %v711
        %v713 = vsub.f32 %v712, %v700
        %v714 = vmul.f32 %v713, %v713
        %v715 = vadd.f32 %v668, %v714
        %v716 = vsel %vm614, %v292, 0.0
        %717 = vadd.xlane.f32.xlu0 %v716
        %v718 = vpop.xlane.xlu0 %717
        %v719 = vmul.f32 %v292, %v292
        %v720 = vsel %vm614, %v719, 0.0
        %721 = vadd.xlane.f32.xlu0 %v720
        %v722 = vpop.xlane.xlu0 %721
        %v723 = vadd.f32 %v676, %v722
        %vm724 = vcmask 518146
        %v725 = vsel %vm724, %v293, 0.0
        %726 = vadd.xlane.f32.xlu0 %v725
        %v727 = vpop.xlane.xlu0 %726
        %v728 = vlaneseq
        %v729 = vshrl.u32 %v728, 7
        %v730 = vsub.s32 2, %v729
        %v731 = vrot.slane %v727, %v730
        %v732 = vmul.f32 %v292, %v601
        %v733 = vsel %vm614, %v732, 0.0
        %734 = vadd.xlane.f32.xlu0 %v733
        %v735 = vpop.xlane.xlu0 %734
        %v736 = vmul.f32 %v292, %v637
        %v737 = vsel %vm614, %v736, 0.0
        %738 = vadd.xlane.f32.xlu0 %v737
        %v739 = vpop.xlane.xlu0 %738
        %v740 = vmul.f32 %v292, %v645
        %v741 = vsel %vm614, %v740, 0.0
        %742 = vadd.xlane.f32.xlu0 %v741
        %v743 = vpop.xlane.xlu0 %742
        %v744 = vrsqrt.pop %v710
        %v745 = vmul.f32 %v710, %v744
        %vm746 = vcmp.eq.f32.partialorder %v710, inf
        %v747 = vsel %vm746, %v710, %v745
        %vm748 = vcmp.eq.f32.partialorder %v710, 0.0
        %v749 = vand.u32 %v710, 2147483648
        %v750 = vsel %vm748, %v749, %v747
        %v751 = vsel %vm614, %v750, 0.0
        %752 = vadd.xlane.f32.xlu0 %v751
        %v753 = vpop.xlane.xlu0 %752
        %v754 = vrcp.pop 64.0
        %v755 = vmul.f32 %v753, %v754
        %v756 = vmul.f32 %v755, 1000.0
        %v757 = vrsqrt.pop %v715
        %v758 = vmul.f32 %v715, %v757
        %vm759 = vcmp.eq.f32.partialorder %v715, inf
        %v760 = vsel %vm759, %v715, %v758
        %vm761 = vcmp.eq.f32.partialorder %v715, 0.0
        %v762 = vand.u32 %v715, 2147483648
        %v763 = vsel %vm761, %v762, %v760
        %vm764 = vcmask 109568
        %v765 = vsel %vm764, %v763, 0.0
        %766 = vadd.xlane.f32.xlu0 %v765
        %v767 = vpop.xlane.xlu0 %766
        %v768 = vrcp.pop 14.0
        %v769 = vmul.f32 %v767, %v768
        %v770 = vmul.f32 %v769, 1000.0
        %772 = vrot.lane.b32.xlu0 %v365, 2
        %v773 = vpop.permute.xlu0 %772
        %776 = vrot.lane.b32.xlu0 %v438, 16
        %v777 = vpop.permute.xlu0 %776
        %780 = vrot.lane.b32.xlu0 %v511, 30
        %v781 = vpop.permute.xlu0 %780
        %784 = vrot.lane.b32.xlu0 %v590, 44
        %v785 = vpop.permute.xlu0 %784
        %788 = vrot.lane.b32.xlu0 %v653, 58
        %v789 = vpop.permute.xlu0 %788
        %792 = vrot.lane.b32.xlu0 %v700, 72
        %v793 = vpop.permute.xlu0 %792
        %vm795 = vcmask 7168
        %v796 = vsel %vm795, %v756, %v770
        %vm797 = vcmask 15360
        %v798 = vsel %vm797, %v796, %v773
        %vm799 = vcmask 130048
        %v800 = vsel %vm799, %v798, %v777
        %vm801 = vcmask 244736
        %v802 = vsel %vm801, %v800, %v781
        %vm803 = vcmask 359424
        %v804 = vsel %vm803, %v802, %v785
        %vm805 = vcmask 474112
        %v806 = vsel %vm805, %v804, %v789
        %vm807 = vcmask 588800
        %v808 = vsel %vm807, %v806, %v793
        %vm809 = vcmask 703488
        %v810 = vsel %vm809, %v808, %v617
        %vm811 = vcmask 711680
        %v812 = vsel %vm811, %v810, %v671
        %vm813 = vcmask 719872
        %v814 = vsel %vm813, %v812, %v718
        %vm815 = vcmask 728064
        %v816 = vsel %vm815, %v814, %v723
        %vm817 = vcmask 736256
        %v818 = vsel %vm817, %v816, %v633
        %vm819 = vcmask 744448
        %v820 = vsel %vm819, %v818, %v641
        %vm821 = vcmask 752640
        %v822 = vsel %vm821, %v820, %v649
        %vm823 = vcmask 760832
        %v824 = vsel %vm823, %v822, %v688
        %v825 = vsel %vm795, %v692, %v696
        %v826 = vsel %vm797, %v825, %v735
        %vm827 = vcmask 23552
        %v828 = vsel %vm827, %v826, %v739
        %vm829 = vcmask 31744
        %v830 = vsel %vm829, %v828, %v743
        %vm831 = vcmask 39936
        %v832 = vsel %vm831, %v830, %v629
        %vm833 = vcmask 48128
        %v834 = vsel %vm833, %v832, %v684
        %vm835 = vcmask 56320
        %v836 = vsel %vm835, %v834, %v731
        %vm837 = vcmask 64512
        %v838 = vsel %vm837, %v836, 0.0
        %840 = vrot.lane.b32.xlu0 %v838, 94
        %v841 = vpop.permute.xlu0 %840
        %vm843 = vcmask 769024
        %v844 = vsel %vm843, %v824, %v841
        %845 = vst [vmem:[%s276] sm:$0xf] %v844
        %s846 = sand.u32 %s136, 1
        %s847 = scalar_lea.sflag [#allocation4], %s846
        %s848 = sand.u32 %s136, 1
        %s849 = smul.addr %s848, 4
        %s850 = scalar_lea.vmem [#allocation3], %s849
        // Predicated region
        $region78: #{tpu_custom_call.1} parent=72 // pred_check
          %p851 = pneg %p146
        $region79: #{tpu_custom_call.1} parent=72 // pred_check_branch
          %853 = sbr.rel (%p851) target = $region81
        $region80: #{tpu_custom_call.1} parent=72 // pred_region
          %s855 = ssub.s32 64, 64
          %856 = vsyncadd %s847, %s855
          %s857 = sadd.s32 %s23, %s22
          %s858 = smul.addr %s857, 64
          %s859 = scalar_lea.hbm %s4, %s858
          %s861 = sshll.u32 %s850, 4
          %s862 = int_to_ptr.vmem [resolvable:$true] %s861
          %864 = dma.vmem_to_hbm [thread:$0]  %s862, 64, %s859, %s847
        $region81: #{tpu_custom_call.1} parent=72 // pred_fallthru
          _
      $region73: #{tpu_custom_call.1} parent=5 // pred_fallthru
        _
      %p865 = scmp.le.s32.totalorder 2, %s13
      // Predicated region
      $region82: #{tpu_custom_call.1} parent=5 // pred_check
        %p866 = pneg %p865
      $region83: #{tpu_custom_call.1} parent=5 // pred_check_branch
        %868 = sbr.rel (%p866) target = $region85
      $region84: #{tpu_custom_call.1} parent=5 // pred_region
        %s869 = ssub.s32 %s13, 2
        // Predicated region
        $region86: #{tpu_custom_call.1} parent=84 // pred_check
          %p870 = pneg %p152
        $region87: #{tpu_custom_call.1} parent=84 // pred_check_branch
          %872 = sbr.rel (%p870) target = $region89
        $region88: #{tpu_custom_call.1} parent=84 // pred_region
          %s873 = sand.u32 %s137, 1
          %s874 = scalar_lea.sflag [#allocation4], %s873
          %s875 = sand.u32 %s137, 1
          %s876 = smul.addr %s875, 4
          %s877 = scalar_lea.vmem [#allocation3], %s876
          %878 = dma.done %s874, 64
        $region89: #{tpu_custom_call.1} parent=84 // pred_fallthru
          _
      $region85: #{tpu_custom_call.1} parent=5 // pred_fallthru
        _
    $region6: #{tpu_custom_call.1} parent=1 // loop_footer
      %s17 = sadd.s32 1, %s13
    $region7: #{tpu_custom_call.1} parent=1 // loop_footer_branch
      %12 = sbr.rel target = $region3
    $region8: #{tpu_custom_call.1} parent=1 // loop_exit
      _
    %879 = vsyncpa [#allocation4], 1
    %s880 = scalar_lea.sflag [#allocation4], 1
    %881 = vsyncpa %s880, 1

</llo_original>
